<compile_context>
chip_gen: v7x
topology: tpu7x:2x2x1
jax: 0.10.0
libtpu: 0.0.40
codegen_flags: <defaults>
</compile_context>

<pallas_src>
import jax
import jax.numpy as jnp
from jax.experimental import pallas as pl
from jax.experimental.pallas import tpu as pltpu


# ----------------------------- fused Pallas kernel ----------------------------
def _ae_fused_kernel(x_ref, a1_ref, b1_ref, a2_ref, b2_ref,
                     a3_ref, b3_ref, a4_ref, b4_ref, o_ref):
    """One batch tile: out = L(L(L(L(x@A1+b1)@A2+b2)@A3+b3)@A4+b4), L = LeakyReLU(0.2)."""
    def layer(h, a_ref, b_ref):
        y = jnp.dot(h, a_ref[...], preferred_element_type=jnp.float32) + b_ref[...]
        return jnp.where(y >= 0.0, y, 0.2 * y)

    h = x_ref[...].astype(jnp.float32)
    h = layer(h, a1_ref, b1_ref)      # conv1  (1 -> 32, k=7, s=2, reflect pad 2)
    h = layer(h, a2_ref, b2_ref)      # conv2  (32 -> 16, k=5, s=2, reflect pad 2)
    h = layer(h, a3_ref, b3_ref)      # convT1 (16 -> 32, k=2, s=2)
    h = layer(h, a4_ref, b4_ref)      # convT2 (32 -> 1,  k=2, s=2)
    o_ref[...] = h.astype(o_ref.dtype)


# ---------------------- one-time parameter preparation ------------------------
def _reflect(i, n):
    """PyTorch 'reflect' padding index map (pad < n)."""
    i = jnp.where(i < 0, -i, i)
    return jnp.where(i >= n, 2 * (n - 1) - i, i)


def prepare_params(params, L):
    """Fold every conv layer (reflect padding + stride + taps) into dense matmul
    weights.  Done once; the per-call forward only runs the fused Pallas kernel."""
    f32 = jnp.float32
    w1 = params["c1_w"].astype(f32); b1 = params["c1_b"].astype(f32)   # (32,1,7), (32,)
    w2 = params["c2_w"].astype(f32); b2 = params["c2_b"].astype(f32)   # (16,32,5), (16,)
    w3 = params["d1_w"].astype(f32); b3 = params["d1_b"].astype(f32)   # (16,32,2), (32,)
    w4 = params["d2_w"].astype(f32); b4 = params["d2_b"].astype(f32)   # (32,1,2), (1,)

    C1, _, K1 = w1.shape
    C2, _, K2 = w2.shape
    _, C3, K3 = w3.shape
    _, _, K4 = w4.shape

    L1 = (L + 4 - K1) // 2 + 1          # 31
    L2 = (L1 + 4 - K2) // 2 + 1         # 16
    L3 = 2 * L2                          # 32
    L4 = 2 * L3                          # 64

    # conv1: x[i] -> h1[t*C1 + co]
    pos1 = _reflect(2 * jnp.arange(L1)[:, None] + jnp.arange(K1)[None, :] - 2, L)   # (L1,K1)
    S1 = (pos1[None, :, :] == jnp.arange(L)[:, None, None]).astype(f32)             # (L,L1,K1)
    A1 = jnp.einsum("itk,ok->ito", S1, w1[:, 0, :]).reshape(L, L1 * C1)
    B1 = jnp.tile(b1, (L1,)).reshape(1, L1 * C1)

    # conv2: h1[t*C1 + ci] -> h2[u*C2 + co]
    pos2 = _reflect(2 * jnp.arange(L2)[:, None] + jnp.arange(K2)[None, :] - 2, L1)  # (L2,K2)
    S2 = (pos2[None, :, :] == jnp.arange(L1)[:, None, None]).astype(f32)            # (L1,L2,K2)
    A2 = jnp.einsum("tuk,ock->tcuo", S2, w2).reshape(L1 * C1, L2 * C2)
    B2 = jnp.tile(b2, (L2,)).reshape(1, L2 * C2)

    # convT1 (kernel == stride == 2): h2[u*C2 + ci] -> h3[p*C3 + co], p = 2u + k
    posT1 = 2 * jnp.arange(L2)[:, None] + jnp.arange(K3)[None, :]                   # (L2,K3)
    S3 = (posT1[None, :, :] == jnp.arange(L3)[:, None, None]).astype(f32)           # (L3,L2,K3)
    A3 = jnp.einsum("puk,cok->ucpo", S3, w3).reshape(L2 * C2, L3 * C3)
    B3 = jnp.tile(b3, (L3,)).reshape(1, L3 * C3)

    # convT2 (kernel == stride == 2): h3[p*C3 + ci] -> out[q], q = 2p + k
    posT2 = 2 * jnp.arange(L3)[:, None] + jnp.arange(K4)[None, :]                   # (L3,K4)
    S4 = (posT2[None, :, :] == jnp.arange(L4)[:, None, None]).astype(f32)           # (L4,L3,K4)
    A4 = jnp.einsum("qpk,ck->pcq", S4, w4[:, 0, :]).reshape(L3 * C3, L4)
    B4 = jnp.tile(b4, (L4,)).reshape(1, L4)

    return {"A1": A1, "B1": B1, "A2": A2, "B2": B2,
            "A3": A3, "B3": B3, "A4": A4, "B4": B4}


# ------------------------------- AE forward -----------------------------------
def ae_forward(prep, x):
    """x: (B, L) -> (B, 4 * L2).  Single fused pallas_call for the whole network."""
    B, L = x.shape
    A1, B1 = prep["A1"], prep["B1"]
    A2, B2 = prep["A2"], prep["B2"]
    A3, B3 = prep["A3"], prep["B3"]
    A4, B4 = prep["A4"], prep["B4"]
    assert A1.shape[0] == L
    L_out = A4.shape[1]

    # Batch tile: rows padded to a sublane-friendly multiple of 8; larger batches are
    # split across grid steps marked "parallel" (megacore / v7x 2-TC friendly).
    bt = 8 if B <= 8 else 128
    nb = -(-B // bt)
    Bp = nb * bt
    xq = x.astype(jnp.float32)
    if Bp != B:
        xq = jnp.pad(xq, ((0, Bp - B), (0, 0)))

    out = pl.pallas_call(
        _ae_fused_kernel,
        out_shape=jax.ShapeDtypeStruct((Bp, L_out), jnp.float32),
        grid=(nb,),
        in_specs=[
            pl.BlockSpec((bt, L), lambda i: (i, 0)),
            pl.BlockSpec(A1.shape, lambda i: (0, 0)),
            pl.BlockSpec(B1.shape, lambda i: (0, 0)),
            pl.BlockSpec(A2.shape, lambda i: (0, 0)),
            pl.BlockSpec(B2.shape, lambda i: (0, 0)),
            pl.BlockSpec(A3.shape, lambda i: (0, 0)),
            pl.BlockSpec(B3.shape, lambda i: (0, 0)),
            pl.BlockSpec(A4.shape, lambda i: (0, 0)),
            pl.BlockSpec(B4.shape, lambda i: (0, 0)),
        ],
        out_specs=pl.BlockSpec((bt, L_out), lambda i: (i, 0)),
        compiler_params=pltpu.CompilerParams(
            dimension_semantics=("parallel",)),
    )(xq, A1, B1, A2, B2, A3, B3, A4, B4)
    return out[:B]


# --------------------------- pure-JAX reference --------------------------------
def _leaky(v):
    return jnp.where(v >= 0.0, v, 0.2 * v)


def ae_reference(params, x):
    """Straightforward JAX implementation of the PyTorch forward (eval mode)."""
    def conv1d_reflect(h, w, b, stride, pad):
        Bn, Cin, Ln = h.shape
        Cout, _, K = w.shape
        hp = jnp.pad(h, ((0, 0), (0, 0), (pad, pad)), mode="reflect")
        Lout = (Ln + 2 * pad - K) // stride + 1
        cols = jnp.stack([hp[:, :, k:k + stride * Lout:stride] for k in range(K)], axis=-1)
        return jnp.einsum("bclk,ock->bol", cols, w) + b[None, :, None]

    def convT(h, w, b, stride):
        Bn, Cin, Ln = h.shape
        _, Cout, K = w.shape
        out = jnp.einsum("bcl,cok->bolk", h, w).reshape(Bn, Cout, Ln * K)
        return out + b[None, :, None]

    h = _leaky(conv1d_reflect(x[:, None, :], params["c1_w"], params["c1_b"], 2, 2))
    h = _leaky(conv1d_reflect(h, params["c2_w"], params["c2_b"], 2, 2))
    h = _leaky(convT(h, params["d1_w"], params["d1_b"], 2))
    h = _leaky(convT(h, params["d2_w"], params["d2_b"], 2))
    return h[:, 0, :]


# ------------------------------- synthetic init --------------------------------
def init_params(key):
    ks = jax.random.split(key, 8)
    s = 0.1  # deterministic synthetic init (not a checkpoint load)
    return {
        "c1_w": s * jax.random.normal(ks[0], (32, 1, 7), jnp.float32),
        "c1_b": s * jax.random.normal(ks[1], (32,), jnp.float32),
        "c2_w": s * jax.random.normal(ks[2], (16, 32, 5), jnp.float32),
        "c2_b": s * jax.random.normal(ks[3], (16,), jnp.float32),
        "d1_w": s * jax.random.normal(ks[4], (16, 32, 2), jnp.float32),  # (Cin, Cout, K)
        "d1_b": s * jax.random.normal(ks[5], (32,), jnp.float32),
        "d2_w": s * jax.random.normal(ks[6], (32, 1, 2), jnp.float32),
        "d2_b": s * jax.random.normal(ks[7], (1,), jnp.float32),
    }


if __name__ == "__main__":
    key = jax.random.PRNGKey(0)
    pkey, xkey = jax.random.split(key)
    params = init_params(pkey)

    B, L = 2, 64                       # L1=31, L2=16, output length=64
    x = jax.random.normal(xkey, (B, L), jnp.float32)

    # Dropout(p=0.2) layers are identity in eval/inference mode, hence omitted.
    prep = prepare_params(params, L)   # one-time weight prep (hoisted out of the forward)
    fwd = jax.jit(ae_forward)
    out = jax.block_until_ready(fwd(prep, x))
    assert out.shape == (B, 64) and out.dtype == jnp.float32

    ref = jax.block_until_ready(jax.jit(ae_reference)(params, x))
    err = float(jnp.max(jnp.abs(out - ref)))
    assert err < 1e-3, f"mismatch vs reference: {err}"

    print("KERNEL_OK")
</pallas_src>

<mosaic_0001>
module attributes {stable_mosaic.version = 11 : i64} {
  func.func @_ae_fused_kernel(%arg0: i32, %arg1: memref<8x64xf32, #tpu.memory_space<vmem>>, %arg2: memref<64x992xf32, #tpu.memory_space<vmem>>, %arg3: memref<1x992xf32, #tpu.memory_space<vmem>>, %arg4: memref<992x256xf32, #tpu.memory_space<vmem>>, %arg5: memref<1x256xf32, #tpu.memory_space<vmem>>, %arg6: memref<256x1024xf32, #tpu.memory_space<vmem>>, %arg7: memref<1x1024xf32, #tpu.memory_space<vmem>>, %arg8: memref<1024x64xf32, #tpu.memory_space<vmem>>, %arg9: memref<1x64xf32, #tpu.memory_space<vmem>>, %arg10: memref<8x64xf32, #tpu.memory_space<vmem>>) attributes {dimension_semantics = [#tpu.dimension_semantics<parallel>], iteration_bounds = array<i64: 1>, scalar_prefetch = 0 : i64, scratch_operands = 0 : i64, tpu.core_type = #tpu.core_type<tc>, window_params = [{transform_indices = @transform_0, window_bounds = array<i64: 8, 64>}, {pipeline_mode = #tpu.pipeline_mode<synchronous>, transform_indices = @transform_1, window_bounds = array<i64: 64, 992>}, {pipeline_mode = #tpu.pipeline_mode<synchronous>, transform_indices = @transform_2, window_bounds = array<i64: 1, 992>}, {pipeline_mode = #tpu.pipeline_mode<synchronous>, transform_indices = @transform_3, window_bounds = array<i64: 992, 256>}, {pipeline_mode = #tpu.pipeline_mode<synchronous>, transform_indices = @transform_4, window_bounds = array<i64: 1, 256>}, {pipeline_mode = #tpu.pipeline_mode<synchronous>, transform_indices = @transform_5, window_bounds = array<i64: 256, 1024>}, {pipeline_mode = #tpu.pipeline_mode<synchronous>, transform_indices = @transform_6, window_bounds = array<i64: 1, 1024>}, {pipeline_mode = #tpu.pipeline_mode<synchronous>, transform_indices = @transform_7, window_bounds = array<i64: 1024, 64>}, {pipeline_mode = #tpu.pipeline_mode<synchronous>, transform_indices = @transform_8, window_bounds = array<i64: 1, 64>}, {transform_indices = @transform_9, window_bounds = array<i64: 8, 64>}]} {
    %c0 = arith.constant 0 : index
    %c0_0 = arith.constant 0 : index
    %0 = vector.load %arg1[%c0, %c0_0] : memref<8x64xf32, #tpu.memory_space<vmem>>, vector<8x64xf32>
    %c0_1 = arith.constant 0 : index
    %c0_2 = arith.constant 0 : index
    %1 = vector.load %arg2[%c0_1, %c0_2] : memref<64x992xf32, #tpu.memory_space<vmem>>, vector<64x992xf32>
    %cst = arith.constant dense<0.000000e+00> : vector<8x992xf32>
    %2 = tpu.matmul %0, %1, %cst {dimension_numbers = #tpu.dot_dimension_numbers<[1], [0], [0], [1], [0, 0, 1, 1], [], []>} : vector<8x64xf32>, vector<64x992xf32>, vector<8x992xf32> -> vector<8x992xf32>
    %c0_3 = arith.constant 0 : index
    %c0_4 = arith.constant 0 : index
    %3 = vector.load %arg3[%c0_3, %c0_4] : memref<1x992xf32, #tpu.memory_space<vmem>>, vector<1x992xf32>
    %4 = vector.broadcast %3 : vector<1x992xf32> to vector<8x992xf32>
    %5 = arith.addf %2, %4 : vector<8x992xf32>
    %cst_5 = arith.constant 0.000000e+00 : f32
    %6 = vector.broadcast %cst_5 : f32 to vector<8x992xf32>
    %7 = arith.cmpf oge, %5, %6 : vector<8x992xf32>
    %cst_6 = arith.constant 2.000000e-01 : f32
    %8 = vector.broadcast %cst_6 : f32 to vector<8x992xf32>
    %9 = arith.mulf %8, %5 : vector<8x992xf32>
    %10 = arith.select %7, %5, %9 : vector<8x992xi1>, vector<8x992xf32>
    %c0_7 = arith.constant 0 : index
    %c0_8 = arith.constant 0 : index
    %11 = vector.load %arg4[%c0_7, %c0_8] : memref<992x256xf32, #tpu.memory_space<vmem>>, vector<992x256xf32>
    %cst_9 = arith.constant dense<0.000000e+00> : vector<8x256xf32>
    %12 = tpu.matmul %10, %11, %cst_9 {dimension_numbers = #tpu.dot_dimension_numbers<[1], [0], [0], [1], [0, 0, 1, 1], [], []>} : vector<8x992xf32>, vector<992x256xf32>, vector<8x256xf32> -> vector<8x256xf32>
    %c0_10 = arith.constant 0 : index
    %c0_11 = arith.constant 0 : index
    %13 = vector.load %arg5[%c0_10, %c0_11] : memref<1x256xf32, #tpu.memory_space<vmem>>, vector<1x256xf32>
    %14 = vector.broadcast %13 : vector<1x256xf32> to vector<8x256xf32>
    %15 = arith.addf %12, %14 : vector<8x256xf32>
    %cst_12 = arith.constant 0.000000e+00 : f32
    %16 = vector.broadcast %cst_12 : f32 to vector<8x256xf32>
    %17 = arith.cmpf oge, %15, %16 : vector<8x256xf32>
    %cst_13 = arith.constant 2.000000e-01 : f32
    %18 = vector.broadcast %cst_13 : f32 to vector<8x256xf32>
    %19 = arith.mulf %18, %15 : vector<8x256xf32>
    %20 = arith.select %17, %15, %19 : vector<8x256xi1>, vector<8x256xf32>
    %c0_14 = arith.constant 0 : index
    %c0_15 = arith.constant 0 : index
    %21 = vector.load %arg6[%c0_14, %c0_15] : memref<256x1024xf32, #tpu.memory_space<vmem>>, vector<256x1024xf32>
    %cst_16 = arith.constant dense<0.000000e+00> : vector<8x1024xf32>
    %22 = tpu.matmul %20, %21, %cst_16 {dimension_numbers = #tpu.dot_dimension_numbers<[1], [0], [0], [1], [0, 0, 1, 1], [], []>} : vector<8x256xf32>, vector<256x1024xf32>, vector<8x1024xf32> -> vector<8x1024xf32>
    %c0_17 = arith.constant 0 : index
    %c0_18 = arith.constant 0 : index
    %23 = vector.load %arg7[%c0_17, %c0_18] : memref<1x1024xf32, #tpu.memory_space<vmem>>, vector<1x1024xf32>
    %24 = vector.broadcast %23 : vector<1x1024xf32> to vector<8x1024xf32>
    %25 = arith.addf %22, %24 : vector<8x1024xf32>
    %cst_19 = arith.constant 0.000000e+00 : f32
    %26 = vector.broadcast %cst_19 : f32 to vector<8x1024xf32>
    %27 = arith.cmpf oge, %25, %26 : vector<8x1024xf32>
    %cst_20 = arith.constant 2.000000e-01 : f32
    %28 = vector.broadcast %cst_20 : f32 to vector<8x1024xf32>
    %29 = arith.mulf %28, %25 : vector<8x1024xf32>
    %30 = arith.select %27, %25, %29 : vector<8x1024xi1>, vector<8x1024xf32>
    %c0_21 = arith.constant 0 : index
    %c0_22 = arith.constant 0 : index
    %31 = vector.load %arg8[%c0_21, %c0_22] : memref<1024x64xf32, #tpu.memory_space<vmem>>, vector<1024x64xf32>
    %cst_23 = arith.constant dense<0.000000e+00> : vector<8x64xf32>
    %32 = tpu.matmul %30, %31, %cst_23 {dimension_numbers = #tpu.dot_dimension_numbers<[1], [0], [0], [1], [0, 0, 1, 1], [], []>} : vector<8x1024xf32>, vector<1024x64xf32>, vector<8x64xf32> -> vector<8x64xf32>
    %c0_24 = arith.constant 0 : index
    %c0_25 = arith.constant 0 : index
    %33 = vector.load %arg9[%c0_24, %c0_25] : memref<1x64xf32, #tpu.memory_space<vmem>>, vector<1x64xf32>
    %34 = vector.broadcast %33 : vector<1x64xf32> to vector<8x64xf32>
    %35 = arith.addf %32, %34 : vector<8x64xf32>
    %cst_26 = arith.constant 0.000000e+00 : f32
    %36 = vector.broadcast %cst_26 : f32 to vector<8x64xf32>
    %37 = arith.cmpf oge, %35, %36 : vector<8x64xf32>
    %cst_27 = arith.constant 2.000000e-01 : f32
    %38 = vector.broadcast %cst_27 : f32 to vector<8x64xf32>
    %39 = arith.mulf %38, %35 : vector<8x64xf32>
    %40 = arith.select %37, %35, %39 : vector<8x64xi1>, vector<8x64xf32>
    %c0_28 = arith.constant 0 : index
    %c0_29 = arith.constant 0 : index
    %41 = vector.load %arg10[%c0_28, %c0_29] : memref<8x64xf32, #tpu.memory_space<vmem>>, vector<8x64xf32>
    tpu.vector_store %arg10[%c0_28, %c0_29], %40 {strides = array<i32>} : memref<8x64xf32, #tpu.memory_space<vmem>>, vector<8x64xf32>,
    return
  }
  func.func @transform_0(%arg0: i32) -> (i32, i32) {
    %c0_i32 = arith.constant 0 : i32
    %c0_i32_0 = arith.constant 0 : i32
    return %arg0, %c0_i32 : i32, i32
  }
  func.func @transform_1(%arg0: i32) -> (i32, i32) {
    %c0_i32 = arith.constant 0 : i32
    %c0_i32_0 = arith.constant 0 : i32
    %c0_i32_1 = arith.constant 0 : i32
    return %c0_i32, %c0_i32_0 : i32, i32
  }
  func.func @transform_2(%arg0: i32) -> (i32, i32) {
    %c0_i32 = arith.constant 0 : i32
    %c0_i32_0 = arith.constant 0 : i32
    %c0_i32_1 = arith.constant 0 : i32
    return %c0_i32, %c0_i32_0 : i32, i32
  }
  func.func @transform_3(%arg0: i32) -> (i32, i32) {
    %c0_i32 = arith.constant 0 : i32
    %c0_i32_0 = arith.constant 0 : i32
    %c0_i32_1 = arith.constant 0 : i32
    return %c0_i32, %c0_i32_0 : i32, i32
  }
  func.func @transform_4(%arg0: i32) -> (i32, i32) {
    %c0_i32 = arith.constant 0 : i32
    %c0_i32_0 = arith.constant 0 : i32
    %c0_i32_1 = arith.constant 0 : i32
    return %c0_i32, %c0_i32_0 : i32, i32
  }
  func.func @transform_5(%arg0: i32) -> (i32, i32) {
    %c0_i32 = arith.constant 0 : i32
    %c0_i32_0 = arith.constant 0 : i32
    %c0_i32_1 = arith.constant 0 : i32
    return %c0_i32, %c0_i32_0 : i32, i32
  }
  func.func @transform_6(%arg0: i32) -> (i32, i32) {
    %c0_i32 = arith.constant 0 : i32
    %c0_i32_0 = arith.constant 0 : i32
    %c0_i32_1 = arith.constant 0 : i32
    return %c0_i32, %c0_i32_0 : i32, i32
  }
  func.func @transform_7(%arg0: i32) -> (i32, i32) {
    %c0_i32 = arith.constant 0 : i32
    %c0_i32_0 = arith.constant 0 : i32
    %c0_i32_1 = arith.constant 0 : i32
    return %c0_i32, %c0_i32_0 : i32, i32
  }
  func.func @transform_8(%arg0: i32) -> (i32, i32) {
    %c0_i32 = arith.constant 0 : i32
    %c0_i32_0 = arith.constant 0 : i32
    %c0_i32_1 = arith.constant 0 : i32
    return %c0_i32, %c0_i32_0 : i32, i32
  }
  func.func @transform_9(%arg0: i32) -> (i32, i32) {
    %c0_i32 = arith.constant 0 : i32
    %c0_i32_0 = arith.constant 0 : i32
    return %arg0, %c0_i32 : i32, i32
  }
}

</mosaic_0001>

<llo_original>
// kernel: ae_forward.1
$region0: #{ae_forward.1}
  #allocation0 [shape = 'u32[]', space=smem, size = 0x4, offset = 0x4, fixed_abs, tag = 'smem constant byte address 0x4 - core index']
  #allocation1 [shape = 'u32[144,128]{1,0:T(1,128)}', space=vmem, size = 0x12000, scoped, tag = 'internal scratch']
  %s0 = inlined_call_operand.vmem [shape: f32[8,64], index: 0, kind: input, shape index: {}]
  %s1 = inlined_call_operand.vmem [shape: f32[64,992], index: 1, kind: input, shape index: {}]
  %s2 = inlined_call_operand.vmem [shape: f32[1,992], index: 2, kind: input, shape index: {}]
  %s3 = inlined_call_operand.hbm [shape: f32[992,256], index: 3, kind: input, shape index: {}]
  %s4 = inlined_call_operand.vmem [shape: f32[1,256], index: 4, kind: input, shape index: {}]
  %s5 = inlined_call_operand.hbm [shape: f32[256,1024], index: 5, kind: input, shape index: {}]
  %s6 = inlined_call_operand.vmem [shape: f32[1,1024], index: 6, kind: input, shape index: {}]
  %s7 = inlined_call_operand.vmem [shape: f32[1024,64], index: 7, kind: input, shape index: {}]
  %s8 = inlined_call_operand.vmem [shape: f32[1,64], index: 8, kind: input, shape index: {}]
  %s9 = inlined_call_operand.vmem [shape: f32[8,64], index: 9, kind: output, shape index: {}]
  %s10 = sld [smem:[#allocation0]]
  $region54: #{ae_forward.1} parent=0
    _
  %s12 = ssub.s32 1, %s10
  %s13 = scalar_select 0, %s12, %s10
  $region1: #{ae_forward.1} parent=0
    #allocation2 [shape = 'u8[1015808]{0}', space=vmem, size = 0xf8000, scoped, tag = 'input window, operand 3, single buffered']
    #allocation3 [shape = 's32[1]{0}', space=sflag, size = 0x4, scoped, tag = 'scoped memory for ae_forward.1']
    #allocation4 [shape = 'u8[1048576]{0}', space=vmem, size = 0x100000, scoped, tag = 'input window, operand 5, single buffered']
    #allocation5 [shape = 's32[1]{0}', space=sflag, size = 0x4, scoped, tag = 'scoped memory for ae_forward.1']
    %14 = vsyncpa [#allocation3], 0
    %15 = vsyncpa [#allocation5], 0
    // Predicated region
    $region2: #{ae_forward.1} parent=1 // pred_check
      _
    $region3: #{ae_forward.1} parent=1 // pred_check_branch
      %17 = sbr.rel (0) target = $region5
    $region4: #{ae_forward.1} parent=1 // pred_region
      _
    $region5: #{ae_forward.1} parent=1 // pred_fallthru
      _
    // Predicated region
    $region6: #{ae_forward.1} parent=1 // pred_check
      _
    $region7: #{ae_forward.1} parent=1 // pred_check_branch
      %19 = sbr.rel (0) target = $region9
    $region8: #{ae_forward.1} parent=1 // pred_region
      _
    $region9: #{ae_forward.1} parent=1 // pred_fallthru
      _
    // Predicated region
    $region10: #{ae_forward.1} parent=1 // pred_check
      _
    $region11: #{ae_forward.1} parent=1 // pred_check_branch
      %21 = sbr.rel (0) target = $region13
    $region12: #{ae_forward.1} parent=1 // pred_region
      _
    $region13: #{ae_forward.1} parent=1 // pred_fallthru
      _
    // Predicated region
    $region14: #{ae_forward.1} parent=1 // pred_check
      _
    $region15: #{ae_forward.1} parent=1 // pred_check_branch
      %23 = sbr.rel (0) target = $region17
    $region16: #{ae_forward.1} parent=1 // pred_region
      %s25 = ssub.s32 31744, 31744
      %26 = vsyncadd [#allocation3], %s25
      %s27 = sshll.u32 [#allocation2], 4
      %s28 = int_to_ptr.vmem [resolvable:$true] %s27
      %33 = dma.hbm_to_vmem [thread:$0]  %s3, 31744, %s28, [#allocation3], 256, 256, 16
    $region17: #{ae_forward.1} parent=1 // pred_fallthru
      _
    // Predicated region
    $region18: #{ae_forward.1} parent=1 // pred_check
      _
    $region19: #{ae_forward.1} parent=1 // pred_check_branch
      %35 = sbr.rel (0) target = $region21
    $region20: #{ae_forward.1} parent=1 // pred_region
      _
    $region21: #{ae_forward.1} parent=1 // pred_fallthru
      _
    // Predicated region
    $region22: #{ae_forward.1} parent=1 // pred_check
      _
    $region23: #{ae_forward.1} parent=1 // pred_check_branch
      %37 = sbr.rel (0) target = $region25
    $region24: #{ae_forward.1} parent=1 // pred_region
      %s39 = ssub.s32 32768, 32768
      %40 = vsyncadd [#allocation5], %s39
      %s41 = sshll.u32 [#allocation4], 4
      %s42 = int_to_ptr.vmem [resolvable:$true] %s41
      %47 = dma.hbm_to_vmem [thread:$0]  %s5, 32768, %s42, [#allocation5], 1024, 1024, 64
    $region25: #{ae_forward.1} parent=1 // pred_fallthru
      _
    // Predicated region
    $region26: #{ae_forward.1} parent=1 // pred_check
      _
    $region27: #{ae_forward.1} parent=1 // pred_check_branch
      %49 = sbr.rel (0) target = $region29
    $region28: #{ae_forward.1} parent=1 // pred_region
      _
    $region29: #{ae_forward.1} parent=1 // pred_fallthru
      _
    // Predicated region
    $region30: #{ae_forward.1} parent=1 // pred_check
      _
    $region31: #{ae_forward.1} parent=1 // pred_check_branch
      %51 = sbr.rel (0) target = $region33
    $region32: #{ae_forward.1} parent=1 // pred_region
      _
    $region33: #{ae_forward.1} parent=1 // pred_fallthru
      _
    // Predicated region
    $region34: #{ae_forward.1} parent=1 // pred_check
      _
    $region35: #{ae_forward.1} parent=1 // pred_check_branch
      %53 = sbr.rel (0) target = $region37
    $region36: #{ae_forward.1} parent=1 // pred_region
      _
    $region37: #{ae_forward.1} parent=1 // pred_fallthru
      _
    // Predicated region
    $region38: #{ae_forward.1} parent=1 // pred_check
      _
    $region39: #{ae_forward.1} parent=1 // pred_check_branch
      %55 = sbr.rel (0) target = $region41
    $region40: #{ae_forward.1} parent=1 // pred_region
      %56 = dma.done [#allocation3], 31744
    $region41: #{ae_forward.1} parent=1 // pred_fallthru
      _
    // Predicated region
    $region42: #{ae_forward.1} parent=1 // pred_check
      _
    $region43: #{ae_forward.1} parent=1 // pred_check_branch
      %58 = sbr.rel (0) target = $region45
    $region44: #{ae_forward.1} parent=1 // pred_region
      %59 = dma.done [#allocation5], 32768
    $region45: #{ae_forward.1} parent=1 // pred_fallthru
      _
    %v60 = vld [vmem:[%s0] sm:$0xff]
    %v61 = vld [vmem:[%s1] sm:$0xff]
    %v62 = vld [vmem:[%s1 + $0x8] sm:$0xff]
    %v63 = vld [vmem:[%s1 + $0x10] sm:$0xff]
    %v64 = vld [vmem:[%s1 + $0x18] sm:$0xff]
    %v65 = vld [vmem:[%s1 + $0x20] sm:$0xff]
    %v66 = vld [vmem:[%s1 + $0x28] sm:$0xff]
    %v67 = vld [vmem:[%s1 + $0x30] sm:$0xff]
    %v68 = vld [vmem:[%s1 + $0x38] sm:$0xff]
    %v69 = vld [vmem:[%s1 + $0x40] sm:$0xff]
    %v70 = vld [vmem:[%s1 + $0x48] sm:$0xff]
    %v71 = vld [vmem:[%s1 + $0x50] sm:$0xff]
    %v72 = vld [vmem:[%s1 + $0x58] sm:$0xff]
    %v73 = vld [vmem:[%s1 + $0x60] sm:$0xff]
    %v74 = vld [vmem:[%s1 + $0x68] sm:$0xff]
    %v75 = vld [vmem:[%s1 + $0x70] sm:$0xff]
    %v76 = vld [vmem:[%s1 + $0x78] sm:$0xff]
    %v77 = vld [vmem:[%s1 + $0x80] sm:$0xff]
    %v78 = vld [vmem:[%s1 + $0x88] sm:$0xff]
    %v79 = vld [vmem:[%s1 + $0x90] sm:$0xff]
    %v80 = vld [vmem:[%s1 + $0x98] sm:$0xff]
    %v81 = vld [vmem:[%s1 + $0xa0] sm:$0xff]
    %v82 = vld [vmem:[%s1 + $0xa8] sm:$0xff]
    %v83 = vld [vmem:[%s1 + $0xb0] sm:$0xff]
    %v84 = vld [vmem:[%s1 + $0xb8] sm:$0xff]
    %v85 = vld [vmem:[%s1 + $0xc0] sm:$0xff]
    %v86 = vld [vmem:[%s1 + $0xc8] sm:$0xff]
    %v87 = vld [vmem:[%s1 + $0xd0] sm:$0xff]
    %v88 = vld [vmem:[%s1 + $0xd8] sm:$0xff]
    %v89 = vld [vmem:[%s1 + $0xe0] sm:$0xff]
    %v90 = vld [vmem:[%s1 + $0xe8] sm:$0xff]
    %v91 = vld [vmem:[%s1 + $0xf0] sm:$0xff]
    %v92 = vld [vmem:[%s1 + $0xf8] sm:$0xff]
    %v93 = vld [vmem:[%s1 + $0x100] sm:$0xff]
    %v94 = vld [vmem:[%s1 + $0x108] sm:$0xff]
    %v95 = vld [vmem:[%s1 + $0x110] sm:$0xff]
    %v96 = vld [vmem:[%s1 + $0x118] sm:$0xff]
    %v97 = vld [vmem:[%s1 + $0x120] sm:$0xff]
    %v98 = vld [vmem:[%s1 + $0x128] sm:$0xff]
    %v99 = vld [vmem:[%s1 + $0x130] sm:$0xff]
    %v100 = vld [vmem:[%s1 + $0x138] sm:$0xff]
    %v101 = vld [vmem:[%s1 + $0x140] sm:$0xff]
    %v102 = vld [vmem:[%s1 + $0x148] sm:$0xff]
    %v103 = vld [vmem:[%s1 + $0x150] sm:$0xff]
    %v104 = vld [vmem:[%s1 + $0x158] sm:$0xff]
    %v105 = vld [vmem:[%s1 + $0x160] sm:$0xff]
    %v106 = vld [vmem:[%s1 + $0x168] sm:$0xff]
    %v107 = vld [vmem:[%s1 + $0x170] sm:$0xff]
    %v108 = vld [vmem:[%s1 + $0x178] sm:$0xff]
    %v109 = vld [vmem:[%s1 + $0x180] sm:$0xff]
    %v110 = vld [vmem:[%s1 + $0x188] sm:$0xff]
    %v111 = vld [vmem:[%s1 + $0x190] sm:$0xff]
    %v112 = vld [vmem:[%s1 + $0x198] sm:$0xff]
    %v113 = vld [vmem:[%s1 + $0x1a0] sm:$0xff]
    %v114 = vld [vmem:[%s1 + $0x1a8] sm:$0xff]
    %v115 = vld [vmem:[%s1 + $0x1b0] sm:$0xff]
    %v116 = vld [vmem:[%s1 + $0x1b8] sm:$0xff]
    %v117 = vld [vmem:[%s1 + $0x1c0] sm:$0xff]
    %v118 = vld [vmem:[%s1 + $0x1c8] sm:$0xff]
    %v119 = vld [vmem:[%s1 + $0x1d0] sm:$0xff]
    %v120 = vld [vmem:[%s1 + $0x1d8] sm:$0xff]
    %v121 = vld [vmem:[%s1 + $0x1e0] sm:$0xff]
    %v122 = vld [vmem:[%s1 + $0x1e8] sm:$0xff]
    %v123 = vld [vmem:[%s1 + $0x1f0] sm:$0xff]
    %v124 = vld [vmem:[%s1 + $0x1f8] sm:$0xff]
    %v125 = vld [vmem:[%s2] sm:$0xff]
    %v127 = vlaneseq
    %v128 = vshrl.u32 %v127, 7
    %v129 = vsub.s32 0, %v128
    %v130 = vrot.slane %v125, %v129
    %v131 = vlaneseq
    %v132 = vshrl.u32 %v131, 7
    %v133 = vsub.s32 1, %v132
    %v134 = vrot.slane %v125, %v133
    %v135 = vlaneseq
    %v136 = vshrl.u32 %v135, 7
    %v137 = vsub.s32 2, %v136
    %v138 = vrot.slane %v125, %v137
    %v139 = vlaneseq
    %v140 = vshrl.u32 %v139, 7
    %v141 = vsub.s32 3, %v140
    %v142 = vrot.slane %v125, %v141
    %v143 = vlaneseq
    %v144 = vshrl.u32 %v143, 7
    %v145 = vsub.s32 4, %v144
    %v146 = vrot.slane %v125, %v145
    %v147 = vlaneseq
    %v148 = vshrl.u32 %v147, 7
    %v149 = vsub.s32 5, %v148
    %v150 = vrot.slane %v125, %v149
    %v151 = vlaneseq
    %v152 = vshrl.u32 %v151, 7
    %v153 = vsub.s32 6, %v152
    %v154 = vrot.slane %v125, %v153
    %v155 = vlaneseq
    %v156 = vshrl.u32 %v155, 7
    %v157 = vsub.s32 7, %v156
    %v158 = vrot.slane %v125, %v157
    %vm167 = vcmask 523264
    %v169 = vsel %vm167, %v60, 0
    %171 = vmatprep.subr.mxu0 %v62
    %172 = vmatpush1.msra.mxu0 %v61
    %173 = vmatprep.subr.mxu0 %v70
    %174 = vmatpush1.msra.mxu0 %v69
    %175 = vmatprep.subr.mxu0 %v78
    %176 = vmatpush1.msra.mxu0 %v77
    %177 = vmatprep.subr.mxu0 %v86
    %178 = vmatpush1.msra.mxu0 %v85
    %179 = vmatprep.subr.mxu0 %v94
    %180 = vmatpush1.msra.mxu0 %v93
    %181 = vmatprep.subr.mxu0 %v102
    %182 = vmatpush1.msra.mxu0 %v101
    %183 = vmatprep.subr.mxu0 %v110
    %184 = vmatpush1.msra.mxu0 %v109
    %185 = vmatprep.subr.mxu0 %v118
    %186 = vmatpush1.msra.mxu0 %v117
    %187 = vmatprep.subr.mxu0 0.0
    %188 = vmatpush1.msra.mxu0 0.0
    %189 = vmatprep.subr.mxu0 0.0
    %190 = vmatpush1.msra.mxu0 0.0
    %191 = vmatprep.subr.mxu0 0.0
    %192 = vmatpush1.msra.mxu0 0.0
    %193 = vmatprep.subr.mxu0 0.0
    %194 = vmatpush1.msra.mxu0 0.0
    %195 = vmatprep.subr.mxu0 0.0
    %196 = vmatpush1.msra.mxu0 0.0
    %197 = vmatprep.subr.mxu0 0.0
    %198 = vmatpush1.msra.mxu0 0.0
    %199 = vmatprep.subr.mxu0 0.0
    %200 = vmatpush1.msra.mxu0 0.0
    %201 = vmatprep.subr.mxu0 0.0
    %202 = vmatpush1.msra.mxu0 0.0
    %203 = vmatprep.subr.mxu0 0.0
    %204 = vmatpush1.msra.mxu0 0.0
    %205 = vmatprep.subr.mxu0 0.0
    %206 = vmatpush1.msra.mxu0 0.0
    %207 = vmatprep.subr.mxu0 0.0
    %208 = vmatpush1.msra.mxu0 0.0
    %209 = vmatprep.subr.mxu0 0.0
    %210 = vmatpush1.msra.mxu0 0.0
    %211 = vmatprep.subr.mxu0 0.0
    %212 = vmatpush1.msra.mxu0 0.0
    %213 = vmatprep.subr.mxu0 0.0
    %214 = vmatpush1.msra.mxu0 0.0
    %215 = vmatprep.subr.mxu0 0.0
    %216 = vmatpush1.msra.mxu0 0.0
    %217 = vmatprep.subr.mxu0 0.0
    %218 = vmatpush1.msra.mxu0 0.0
    %219 = vmatprep.subr.mxu0 0.0
    %220 = vmatpush1.msra.mxu0 0.0
    %221 = vmatprep.subr.mxu0 0.0
    %222 = vmatpush1.msra.mxu0 0.0
    %223 = vmatprep.subr.mxu0 0.0
    %224 = vmatpush1.msra.mxu0 0.0
    %225 = vmatprep.subr.mxu0 0.0
    %226 = vmatpush1.msra.mxu0 0.0
    %227 = vmatprep.subr.mxu0 0.0
    %228 = vmatpush1.msra.mxu0 0.0
    %229 = vmatprep.subr.mxu0 0.0
    %230 = vmatpush1.msra.mxu0 0.0
    %231 = vmatprep.subr.mxu0 0.0
    %232 = vmatpush1.msra.mxu0 0.0
    %233 = vmatprep.subr.mxu0 0.0
    %234 = vmatpush1.msra.mxu0 0.0
    %235 = vmatprep.mubr.f32.mxu0 0.0
    %236 = vmatmul.mubr.f32.gmra.mrb[0].mxu0 %v169
    %v237 = vpop.f32.mrb[0].mxu0
    %v238 = vadd.f32 %v130, %v237
    %v239 = vpop.f32.mrb[0].mxu0
    %v240 = vadd.f32 %v134, %v239
    %241 = vdwg.mxu0
    %242 = vmatprep.subr.mxu0 %v64
    %243 = vmatpush1.msra.mxu0 %v63
    %244 = vmatprep.subr.mxu0 %v72
    %245 = vmatpush1.msra.mxu0 %v71
    %246 = vmatprep.subr.mxu0 %v80
    %247 = vmatpush1.msra.mxu0 %v79
    %248 = vmatprep.subr.mxu0 %v88
    %249 = vmatpush1.msra.mxu0 %v87
    %250 = vmatprep.subr.mxu0 %v96
    %251 = vmatpush1.msra.mxu0 %v95
    %252 = vmatprep.subr.mxu0 %v104
    %253 = vmatpush1.msra.mxu0 %v103
    %254 = vmatprep.subr.mxu0 %v112
    %255 = vmatpush1.msra.mxu0 %v111
    %256 = vmatprep.subr.mxu0 %v120
    %257 = vmatpush1.msra.mxu0 %v119
    %258 = vmatprep.subr.mxu0 0.0
    %259 = vmatpush1.msra.mxu0 0.0
    %260 = vmatprep.subr.mxu0 0.0
    %261 = vmatpush1.msra.mxu0 0.0
    %262 = vmatprep.subr.mxu0 0.0
    %263 = vmatpush1.msra.mxu0 0.0
    %264 = vmatprep.subr.mxu0 0.0
    %265 = vmatpush1.msra.mxu0 0.0
    %266 = vmatprep.subr.mxu0 0.0
    %267 = vmatpush1.msra.mxu0 0.0
    %268 = vmatprep.subr.mxu0 0.0
    %269 = vmatpush1.msra.mxu0 0.0
    %270 = vmatprep.subr.mxu0 0.0
    %271 = vmatpush1.msra.mxu0 0.0
    %272 = vmatprep.subr.mxu0 0.0
    %273 = vmatpush1.msra.mxu0 0.0
    %274 = vmatprep.subr.mxu0 0.0
    %275 = vmatpush1.msra.mxu0 0.0
    %276 = vmatprep.subr.mxu0 0.0
    %277 = vmatpush1.msra.mxu0 0.0
    %278 = vmatprep.subr.mxu0 0.0
    %279 = vmatpush1.msra.mxu0 0.0
    %280 = vmatprep.subr.mxu0 0.0
    %281 = vmatpush1.msra.mxu0 0.0
    %282 = vmatprep.subr.mxu0 0.0
    %283 = vmatpush1.msra.mxu0 0.0
    %284 = vmatprep.subr.mxu0 0.0
    %285 = vmatpush1.msra.mxu0 0.0
    %286 = vmatprep.subr.mxu0 0.0
    %287 = vmatpush1.msra.mxu0 0.0
    %288 = vmatprep.subr.mxu0 0.0
    %289 = vmatpush1.msra.mxu0 0.0
    %290 = vmatprep.subr.mxu0 0.0
    %291 = vmatpush1.msra.mxu0 0.0
    %292 = vmatprep.subr.mxu0 0.0
    %293 = vmatpush1.msra.mxu0 0.0
    %294 = vmatprep.subr.mxu0 0.0
    %295 = vmatpush1.msra.mxu0 0.0
    %296 = vmatprep.subr.mxu0 0.0
    %297 = vmatpush1.msra.mxu0 0.0
    %298 = vmatprep.subr.mxu0 0.0
    %299 = vmatpush1.msra.mxu0 0.0
    %300 = vmatprep.subr.mxu0 0.0
    %301 = vmatpush1.msra.mxu0 0.0
    %302 = vmatprep.subr.mxu0 0.0
    %303 = vmatpush1.msra.mxu0 0.0
    %304 = vmatprep.subr.mxu0 0.0
    %305 = vmatpush1.msra.mxu0 0.0
    %306 = vmatprep.mubr.f32.mxu0 0.0
    %307 = vmatmul.mubr.f32.gmra.mrb[0].mxu0 %v169
    %v308 = vpop.f32.mrb[0].mxu0
    %v309 = vadd.f32 %v138, %v308
    %v310 = vpop.f32.mrb[0].mxu0
    %v311 = vadd.f32 %v142, %v310
    %312 = vdwg.mxu0
    %313 = vmatprep.subr.mxu0 %v66
    %314 = vmatpush1.msra.mxu0 %v65
    %315 = vmatprep.subr.mxu0 %v74
    %316 = vmatpush1.msra.mxu0 %v73
    %317 = vmatprep.subr.mxu0 %v82
    %318 = vmatpush1.msra.mxu0 %v81
    %319 = vmatprep.subr.mxu0 %v90
    %320 = vmatpush1.msra.mxu0 %v89
    %321 = vmatprep.subr.mxu0 %v98
    %322 = vmatpush1.msra.mxu0 %v97
    %323 = vmatprep.subr.mxu0 %v106
    %324 = vmatpush1.msra.mxu0 %v105
    %325 = vmatprep.subr.mxu0 %v114
    %326 = vmatpush1.msra.mxu0 %v113
    %327 = vmatprep.subr.mxu0 %v122
    %328 = vmatpush1.msra.mxu0 %v121
    %329 = vmatprep.subr.mxu0 0.0
    %330 = vmatpush1.msra.mxu0 0.0
    %331 = vmatprep.subr.mxu0 0.0
    %332 = vmatpush1.msra.mxu0 0.0
    %333 = vmatprep.subr.mxu0 0.0
    %334 = vmatpush1.msra.mxu0 0.0
    %335 = vmatprep.subr.mxu0 0.0
    %336 = vmatpush1.msra.mxu0 0.0
    %337 = vmatprep.subr.mxu0 0.0
    %338 = vmatpush1.msra.mxu0 0.0
    %339 = vmatprep.subr.mxu0 0.0
    %340 = vmatpush1.msra.mxu0 0.0
    %341 = vmatprep.subr.mxu0 0.0
    %342 = vmatpush1.msra.mxu0 0.0
    %343 = vmatprep.subr.mxu0 0.0
    %344 = vmatpush1.msra.mxu0 0.0
    %345 = vmatprep.subr.mxu0 0.0
    %346 = vmatpush1.msra.mxu0 0.0
    %347 = vmatprep.subr.mxu0 0.0
    %348 = vmatpush1.msra.mxu0 0.0
    %349 = vmatprep.subr.mxu0 0.0
    %350 = vmatpush1.msra.mxu0 0.0
    %351 = vmatprep.subr.mxu0 0.0
    %352 = vmatpush1.msra.mxu0 0.0
    %353 = vmatprep.subr.mxu0 0.0
    %354 = vmatpush1.msra.mxu0 0.0
    %355 = vmatprep.subr.mxu0 0.0
    %356 = vmatpush1.msra.mxu0 0.0
    %357 = vmatprep.subr.mxu0 0.0
    %358 = vmatpush1.msra.mxu0 0.0
    %359 = vmatprep.subr.mxu0 0.0
    %360 = vmatpush1.msra.mxu0 0.0
    %361 = vmatprep.subr.mxu0 0.0
    %362 = vmatpush1.msra.mxu0 0.0
    %363 = vmatprep.subr.mxu0 0.0
    %364 = vmatpush1.msra.mxu0 0.0
    %365 = vmatprep.subr.mxu0 0.0
    %366 = vmatpush1.msra.mxu0 0.0
    %367 = vmatprep.subr.mxu0 0.0
    %368 = vmatpush1.msra.mxu0 0.0
    %369 = vmatprep.subr.mxu0 0.0
    %370 = vmatpush1.msra.mxu0 0.0
    %371 = vmatprep.subr.mxu0 0.0
    %372 = vmatpush1.msra.mxu0 0.0
    %373 = vmatprep.subr.mxu0 0.0
    %374 = vmatpush1.msra.mxu0 0.0
    %375 = vmatprep.subr.mxu0 0.0
    %376 = vmatpush1.msra.mxu0 0.0
    %377 = vmatprep.mubr.f32.mxu0 0.0
    %378 = vmatmul.mubr.f32.gmra.mrb[0].mxu0 %v169
    %v379 = vpop.f32.mrb[0].mxu0
    %v380 = vadd.f32 %v146, %v379
    %v381 = vpop.f32.mrb[0].mxu0
    %v382 = vadd.f32 %v150, %v381
    %383 = vdwg.mxu0
    %384 = vmatprep.subr.mxu0 %v68
    %385 = vmatpush1.msra.mxu0 %v67
    %386 = vmatprep.subr.mxu0 %v76
    %387 = vmatpush1.msra.mxu0 %v75
    %388 = vmatprep.subr.mxu0 %v84
    %389 = vmatpush1.msra.mxu0 %v83
    %390 = vmatprep.subr.mxu0 %v92
    %391 = vmatpush1.msra.mxu0 %v91
    %392 = vmatprep.subr.mxu0 %v100
    %393 = vmatpush1.msra.mxu0 %v99
    %394 = vmatprep.subr.mxu0 %v108
    %395 = vmatpush1.msra.mxu0 %v107
    %396 = vmatprep.subr.mxu0 %v116
    %397 = vmatpush1.msra.mxu0 %v115
    %398 = vmatprep.subr.mxu0 %v124
    %399 = vmatpush1.msra.mxu0 %v123
    %400 = vmatprep.subr.mxu0 0.0
    %401 = vmatpush1.msra.mxu0 0.0
    %402 = vmatprep.subr.mxu0 0.0
    %403 = vmatpush1.msra.mxu0 0.0
    %404 = vmatprep.subr.mxu0 0.0
    %405 = vmatpush1.msra.mxu0 0.0
    %406 = vmatprep.subr.mxu0 0.0
    %407 = vmatpush1.msra.mxu0 0.0
    %408 = vmatprep.subr.mxu0 0.0
    %409 = vmatpush1.msra.mxu0 0.0
    %410 = vmatprep.subr.mxu0 0.0
    %411 = vmatpush1.msra.mxu0 0.0
    %412 = vmatprep.subr.mxu0 0.0
    %413 = vmatpush1.msra.mxu0 0.0
    %414 = vmatprep.subr.mxu0 0.0
    %415 = vmatpush1.msra.mxu0 0.0
    %416 = vmatprep.subr.mxu0 0.0
    %417 = vmatpush1.msra.mxu0 0.0
    %418 = vmatprep.subr.mxu0 0.0
    %419 = vmatpush1.msra.mxu0 0.0
    %420 = vmatprep.subr.mxu0 0.0
    %421 = vmatpush1.msra.mxu0 0.0
    %422 = vmatprep.subr.mxu0 0.0
    %423 = vmatpush1.msra.mxu0 0.0
    %424 = vmatprep.subr.mxu0 0.0
    %425 = vmatpush1.msra.mxu0 0.0
    %426 = vmatprep.subr.mxu0 0.0
    %427 = vmatpush1.msra.mxu0 0.0
    %428 = vmatprep.subr.mxu0 0.0
    %429 = vmatpush1.msra.mxu0 0.0
    %430 = vmatprep.subr.mxu0 0.0
    %431 = vmatpush1.msra.mxu0 0.0
    %432 = vmatprep.subr.mxu0 0.0
    %433 = vmatpush1.msra.mxu0 0.0
    %434 = vmatprep.subr.mxu0 0.0
    %435 = vmatpush1.msra.mxu0 0.0
    %436 = vmatprep.subr.mxu0 0.0
    %437 = vmatpush1.msra.mxu0 0.0
    %438 = vmatprep.subr.mxu0 0.0
    %439 = vmatpush1.msra.mxu0 0.0
    %440 = vmatprep.subr.mxu0 0.0
    %441 = vmatpush1.msra.mxu0 0.0
    %442 = vmatprep.subr.mxu0 0.0
    %443 = vmatpush1.msra.mxu0 0.0
    %444 = vmatprep.subr.mxu0 0.0
    %445 = vmatpush1.msra.mxu0 0.0
    %446 = vmatprep.subr.mxu0 0.0
    %447 = vmatpush1.msra.mxu0 0.0
    %448 = vmatprep.mubr.f32.mxu0 0.0
    %449 = vmatmul.mubr.f32.gmra.mrb[0].mxu0 %v169
    %v450 = vpop.f32.mrb[0].mxu0
    %v451 = vadd.f32 %v154, %v450
    %v452 = vpop.f32.mrb[0].mxu0
    %v453 = vadd.f32 %v158, %v452
    %454 = vdwg.mxu0
    %vm455 = vcmp.ge.f32.partialorder %v238, 0.0
    %vm456 = vcmp.ge.f32.partialorder %v240, 0.0
    %vm457 = vcmp.ge.f32.partialorder %v309, 0.0
    %vm458 = vcmp.ge.f32.partialorder %v311, 0.0
    %vm459 = vcmp.ge.f32.partialorder %v380, 0.0
    %vm460 = vcmp.ge.f32.partialorder %v382, 0.0
    %vm461 = vcmp.ge.f32.partialorder %v451, 0.0
    %vm462 = vcmp.ge.f32.partialorder %v453, 0.0
    %v463 = vmul.f32 %v238, 0.2
    %v464 = vmul.f32 %v240, 0.2
    %v465 = vmul.f32 %v309, 0.2
    %v466 = vmul.f32 %v311, 0.2
    %v467 = vmul.f32 %v380, 0.2
    %v468 = vmul.f32 %v382, 0.2
    %v469 = vmul.f32 %v451, 0.2
    %v470 = vmul.f32 %v453, 0.2
    %v471 = vsel %vm455, %v238, %v463
    %v472 = vsel %vm456, %v240, %v464
    %v473 = vsel %vm457, %v309, %v465
    %v474 = vsel %vm458, %v311, %v466
    %v475 = vsel %vm459, %v380, %v467
    %v476 = vsel %vm460, %v382, %v468
    %v477 = vsel %vm461, %v451, %v469
    %v478 = vsel %vm462, %v453, %v470
    %v479 = vld [vmem:[#allocation2] sm:$0xff]
    %v480 = vld [vmem:[#allocation2 + $0x8] sm:$0xff]
    %v481 = vld [vmem:[#allocation2 + $0x10] sm:$0xff]
    %v482 = vld [vmem:[#allocation2 + $0x18] sm:$0xff]
    %v483 = vld [vmem:[#allocation2 + $0x20] sm:$0xff]
    %v484 = vld [vmem:[#allocation2 + $0x28] sm:$0xff]
    %v485 = vld [vmem:[#allocation2 + $0x30] sm:$0xff]
    %v486 = vld [vmem:[#allocation2 + $0x38] sm:$0xff]
    %v487 = vld [vmem:[#allocation2 + $0x40] sm:$0xff]
    %v488 = vld [vmem:[#allocation2 + $0x48] sm:$0xff]
    %v489 = vld [vmem:[#allocation2 + $0x50] sm:$0xff]
    %v490 = vld [vmem:[#allocation2 + $0x58] sm:$0xff]
    %v491 = vld [vmem:[#allocation2 + $0x60] sm:$0xff]
    %v492 = vld [vmem:[#allocation2 + $0x68] sm:$0xff]
    %v493 = vld [vmem:[#allocation2 + $0x70] sm:$0xff]
    %v494 = vld [vmem:[#allocation2 + $0x78] sm:$0xff]
    %v495 = vld [vmem:[#allocation2 + $0x80] sm:$0xff]
    %v496 = vld [vmem:[#allocation2 + $0x88] sm:$0xff]
    %v497 = vld [vmem:[#allocation2 + $0x90] sm:$0xff]
    %v498 = vld [vmem:[#allocation2 + $0x98] sm:$0xff]
    %v499 = vld [vmem:[#allocation2 + $0xa0] sm:$0xff]
    %v500 = vld [vmem:[#allocation2 + $0xa8] sm:$0xff]
    %v501 = vld [vmem:[#allocation2 + $0xb0] sm:$0xff]
    %v502 = vld [vmem:[#allocation2 + $0xb8] sm:$0xff]
    %v503 = vld [vmem:[#allocation2 + $0xc0] sm:$0xff]
    %v504 = vld [vmem:[#allocation2 + $0xc8] sm:$0xff]
    %v505 = vld [vmem:[#allocation2 + $0xd0] sm:$0xff]
    %v506 = vld [vmem:[#allocation2 + $0xd8] sm:$0xff]
    %v507 = vld [vmem:[#allocation2 + $0xe0] sm:$0xff]
    %v508 = vld [vmem:[#allocation2 + $0xe8] sm:$0xff]
    %v509 = vld [vmem:[#allocation2 + $0xf0] sm:$0xff]
    %v510 = vld [vmem:[#allocation2 + $0xf8] sm:$0xff]
    %v511 = vld [vmem:[#allocation2 + $0x100] sm:$0xff]
    %v512 = vld [vmem:[#allocation2 + $0x108] sm:$0xff]
    %v513 = vld [vmem:[#allocation2 + $0x110] sm:$0xff]
    %v514 = vld [vmem:[#allocation2 + $0x118] sm:$0xff]
    %v515 = vld [vmem:[#allocation2 + $0x120] sm:$0xff]
    %v516 = vld [vmem:[#allocation2 + $0x128] sm:$0xff]
    %v517 = vld [vmem:[#allocation2 + $0x130] sm:$0xff]
    %v518 = vld [vmem:[#allocation2 + $0x138] sm:$0xff]
    %v519 = vld [vmem:[#allocation2 + $0x140] sm:$0xff]
    %v520 = vld [vmem:[#allocation2 + $0x148] sm:$0xff]
    %v521 = vld [vmem:[#allocation2 + $0x150] sm:$0xff]
    %v522 = vld [vmem:[#allocation2 + $0x158] sm:$0xff]
    %v523 = vld [vmem:[#allocation2 + $0x160] sm:$0xff]
    %v524 = vld [vmem:[#allocation2 + $0x168] sm:$0xff]
    %v525 = vld [vmem:[#allocation2 + $0x170] sm:$0xff]
    %v526 = vld [vmem:[#allocation2 + $0x178] sm:$0xff]
    %v527 = vld [vmem:[#allocation2 + $0x180] sm:$0xff]
    %v528 = vld [vmem:[#allocation2 + $0x188] sm:$0xff]
    %v529 = vld [vmem:[#allocation2 + $0x190] sm:$0xff]
    %v530 = vld [vmem:[#allocation2 + $0x198] sm:$0xff]
    %v531 = vld [vmem:[#allocation2 + $0x1a0] sm:$0xff]
    %v532 = vld [vmem:[#allocation2 + $0x1a8] sm:$0xff]
    %v533 = vld [vmem:[#allocation2 + $0x1b0] sm:$0xff]
    %v534 = vld [vmem:[#allocation2 + $0x1b8] sm:$0xff]
    %v535 = vld [vmem:[#allocation2 + $0x1c0] sm:$0xff]
    %v536 = vld [vmem:[#allocation2 + $0x1c8] sm:$0xff]
    %v537 = vld [vmem:[#allocation2 + $0x1d0] sm:$0xff]
    %v538 = vld [vmem:[#allocation2 + $0x1d8] sm:$0xff]
    %v539 = vld [vmem:[#allocation2 + $0x1e0] sm:$0xff]
    %v540 = vld [vmem:[#allocation2 + $0x1e8] sm:$0xff]
    %v541 = vld [vmem:[#allocation2 + $0x1f0] sm:$0xff]
    %v542 = vld [vmem:[#allocation2 + $0x1f8] sm:$0xff]
    %v543 = vld [vmem:[#allocation2 + $0x200] sm:$0xff]
    %v544 = vld [vmem:[#allocation2 + $0x208] sm:$0xff]
    %v545 = vld [vmem:[#allocation2 + $0x210] sm:$0xff]
    %v546 = vld [vmem:[#allocation2 + $0x218] sm:$0xff]
    %v547 = vld [vmem:[#allocation2 + $0x220] sm:$0xff]
    %v548 = vld [vmem:[#allocation2 + $0x228] sm:$0xff]
    %v549 = vld [vmem:[#allocation2 + $0x230] sm:$0xff]
    %v550 = vld [vmem:[#allocation2 + $0x238] sm:$0xff]
    %v551 = vld [vmem:[#allocation2 + $0x240] sm:$0xff]
    %v552 = vld [vmem:[#allocation2 + $0x248] sm:$0xff]
    %v553 = vld [vmem:[#allocation2 + $0x250] sm:$0xff]
    %v554 = vld [vmem:[#allocation2 + $0x258] sm:$0xff]
    %v555 = vld [vmem:[#allocation2 + $0x260] sm:$0xff]
    %v556 = vld [vmem:[#allocation2 + $0x268] sm:$0xff]
    %v557 = vld [vmem:[#allocation2 + $0x270] sm:$0xff]
    %v558 = vld [vmem:[#allocation2 + $0x278] sm:$0xff]
    %v559 = vld [vmem:[#allocation2 + $0x280] sm:$0xff]
    %v560 = vld [vmem:[#allocation2 + $0x288] sm:$0xff]
    %v561 = vld [vmem:[#allocation2 + $0x290] sm:$0xff]
    %v562 = vld [vmem:[#allocation2 + $0x298] sm:$0xff]
    %v563 = vld [vmem:[#allocation2 + $0x2a0] sm:$0xff]
    %v564 = vld [vmem:[#allocation2 + $0x2a8] sm:$0xff]
    %v565 = vld [vmem:[#allocation2 + $0x2b0] sm:$0xff]
    %v566 = vld [vmem:[#allocation2 + $0x2b8] sm:$0xff]
    %v567 = vld [vmem:[#allocation2 + $0x2c0] sm:$0xff]
    %v568 = vld [vmem:[#allocation2 + $0x2c8] sm:$0xff]
    %v569 = vld [vmem:[#allocation2 + $0x2d0] sm:$0xff]
    %v570 = vld [vmem:[#allocation2 + $0x2d8] sm:$0xff]
    %v571 = vld [vmem:[#allocation2 + $0x2e0] sm:$0xff]
    %v572 = vld [vmem:[#allocation2 + $0x2e8] sm:$0xff]
    %v573 = vld [vmem:[#allocation2 + $0x2f0] sm:$0xff]
    %v574 = vld [vmem:[#allocation2 + $0x2f8] sm:$0xff]
    %v575 = vld [vmem:[#allocation2 + $0x300] sm:$0xff]
    %v576 = vld [vmem:[#allocation2 + $0x308] sm:$0xff]
    %v577 = vld [vmem:[#allocation2 + $0x310] sm:$0xff]
    %v578 = vld [vmem:[#allocation2 + $0x318] sm:$0xff]
    %v579 = vld [vmem:[#allocation2 + $0x320] sm:$0xff]
    %v580 = vld [vmem:[#allocation2 + $0x328] sm:$0xff]
    %v581 = vld [vmem:[#allocation2 + $0x330] sm:$0xff]
    %v582 = vld [vmem:[#allocation2 + $0x338] sm:$0xff]
    %v583 = vld [vmem:[#allocation2 + $0x340] sm:$0xff]
    %v584 = vld [vmem:[#allocation2 + $0x348] sm:$0xff]
    %v585 = vld [vmem:[#allocation2 + $0x350] sm:$0xff]
    %v586 = vld [vmem:[#allocation2 + $0x358] sm:$0xff]
    %v587 = vld [vmem:[#allocation2 + $0x360] sm:$0xff]
    %v588 = vld [vmem:[#allocation2 + $0x368] sm:$0xff]
    %v589 = vld [vmem:[#allocation2 + $0x370] sm:$0xff]
    %v590 = vld [vmem:[#allocation2 + $0x378] sm:$0xff]
    %v591 = vld [vmem:[#allocation2 + $0x380] sm:$0xff]
    %v592 = vld [vmem:[#allocation2 + $0x388] sm:$0xff]
    %v593 = vld [vmem:[#allocation2 + $0x390] sm:$0xff]
    %v594 = vld [vmem:[#allocation2 + $0x398] sm:$0xff]
    %v595 = vld [vmem:[#allocation2 + $0x3a0] sm:$0xff]
    %v596 = vld [vmem:[#allocation2 + $0x3a8] sm:$0xff]
    %v597 = vld [vmem:[#allocation2 + $0x3b0] sm:$0xff]
    %v598 = vld [vmem:[#allocation2 + $0x3b8] sm:$0xff]
    %v599 = vld [vmem:[#allocation2 + $0x3c0] sm:$0xff]
    %v600 = vld [vmem:[#allocation2 + $0x3c8] sm:$0xff]
    %v601 = vld [vmem:[#allocation2 + $0x3d0] sm:$0xff]
    %v602 = vld [vmem:[#allocation2 + $0x3d8] sm:$0xff]
    %v603 = vld [vmem:[#allocation2 + $0x3e0] sm:$0xff]
    %v604 = vld [vmem:[#allocation2 + $0x3e8] sm:$0xff]
    %v605 = vld [vmem:[#allocation2 + $0x3f0] sm:$0xff]
    %v606 = vld [vmem:[#allocation2 + $0x3f8] sm:$0xff]
    %v607 = vld [vmem:[#allocation2 + $0x400] sm:$0xff]
    %v608 = vld [vmem:[#allocation2 + $0x408] sm:$0xff]
    %v609 = vld [vmem:[#allocation2 + $0x410] sm:$0xff]
    %v610 = vld [vmem:[#allocation2 + $0x418] sm:$0xff]
    %v611 = vld [vmem:[#allocation2 + $0x420] sm:$0xff]
    %v612 = vld [vmem:[#allocation2 + $0x428] sm:$0xff]
    %v613 = vld [vmem:[#allocation2 + $0x430] sm:$0xff]
    %v614 = vld [vmem:[#allocation2 + $0x438] sm:$0xff]
    %v615 = vld [vmem:[#allocation2 + $0x440] sm:$0xff]
    %v616 = vld [vmem:[#allocation2 + $0x448] sm:$0xff]
    %v617 = vld [vmem:[#allocation2 + $0x450] sm:$0xff]
    %v618 = vld [vmem:[#allocation2 + $0x458] sm:$0xff]
    %v619 = vld [vmem:[#allocation2 + $0x460] sm:$0xff]
    %v620 = vld [vmem:[#allocation2 + $0x468] sm:$0xff]
    %v621 = vld [vmem:[#allocation2 + $0x470] sm:$0xff]
    %v622 = vld [vmem:[#allocation2 + $0x478] sm:$0xff]
    %v623 = vld [vmem:[#allocation2 + $0x480] sm:$0xff]
    %v624 = vld [vmem:[#allocation2 + $0x488] sm:$0xff]
    %v625 = vld [vmem:[#allocation2 + $0x490] sm:$0xff]
    %v626 = vld [vmem:[#allocation2 + $0x498] sm:$0xff]
    %v627 = vld [vmem:[#allocation2 + $0x4a0] sm:$0xff]
    %v628 = vld [vmem:[#allocation2 + $0x4a8] sm:$0xff]
    %v629 = vld [vmem:[#allocation2 + $0x4b0] sm:$0xff]
    %v630 = vld [vmem:[#allocation2 + $0x4b8] sm:$0xff]
    %v631 = vld [vmem:[#allocation2 + $0x4c0] sm:$0xff]
    %v632 = vld [vmem:[#allocation2 + $0x4c8] sm:$0xff]
    %v633 = vld [vmem:[#allocation2 + $0x4d0] sm:$0xff]
    %v634 = vld [vmem:[#allocation2 + $0x4d8] sm:$0xff]
    %v635 = vld [vmem:[#allocation2 + $0x4e0] sm:$0xff]
    %v636 = vld [vmem:[#allocation2 + $0x4e8] sm:$0xff]
    %v637 = vld [vmem:[#allocation2 + $0x4f0] sm:$0xff]
    %v638 = vld [vmem:[#allocation2 + $0x4f8] sm:$0xff]
    %v639 = vld [vmem:[#allocation2 + $0x500] sm:$0xff]
    %v640 = vld [vmem:[#allocation2 + $0x508] sm:$0xff]
    %v641 = vld [vmem:[#allocation2 + $0x510] sm:$0xff]
    %v642 = vld [vmem:[#allocation2 + $0x518] sm:$0xff]
    %v643 = vld [vmem:[#allocation2 + $0x520] sm:$0xff]
    %v644 = vld [vmem:[#allocation2 + $0x528] sm:$0xff]
    %v645 = vld [vmem:[#allocation2 + $0x530] sm:$0xff]
    %v646 = vld [vmem:[#allocation2 + $0x538] sm:$0xff]
    %v647 = vld [vmem:[#allocation2 + $0x540] sm:$0xff]
    %v648 = vld [vmem:[#allocation2 + $0x548] sm:$0xff]
    %v649 = vld [vmem:[#allocation2 + $0x550] sm:$0xff]
    %v650 = vld [vmem:[#allocation2 + $0x558] sm:$0xff]
    %v651 = vld [vmem:[#allocation2 + $0x560] sm:$0xff]
    %v652 = vld [vmem:[#allocation2 + $0x568] sm:$0xff]
    %v653 = vld [vmem:[#allocation2 + $0x570] sm:$0xff]
    %v654 = vld [vmem:[#allocation2 + $0x578] sm:$0xff]
    %v655 = vld [vmem:[#allocation2 + $0x580] sm:$0xff]
    %v656 = vld [vmem:[#allocation2 + $0x588] sm:$0xff]
    %v657 = vld [vmem:[#allocation2 + $0x590] sm:$0xff]
    %v658 = vld [vmem:[#allocation2 + $0x598] sm:$0xff]
    %v659 = vld [vmem:[#allocation2 + $0x5a0] sm:$0xff]
    %v660 = vld [vmem:[#allocation2 + $0x5a8] sm:$0xff]
    %v661 = vld [vmem:[#allocation2 + $0x5b0] sm:$0xff]
    %v662 = vld [vmem:[#allocation2 + $0x5b8] sm:$0xff]
    %v663 = vld [vmem:[#allocation2 + $0x5c0] sm:$0xff]
    %v664 = vld [vmem:[#allocation2 + $0x5c8] sm:$0xff]
    %v665 = vld [vmem:[#allocation2 + $0x5d0] sm:$0xff]
    %v666 = vld [vmem:[#allocation2 + $0x5d8] sm:$0xff]
    %v667 = vld [vmem:[#allocation2 + $0x5e0] sm:$0xff]
    %v668 = vld [vmem:[#allocation2 + $0x5e8] sm:$0xff]
    %v669 = vld [vmem:[#allocation2 + $0x5f0] sm:$0xff]
    %v670 = vld [vmem:[#allocation2 + $0x5f8] sm:$0xff]
    %v671 = vld [vmem:[#allocation2 + $0x600] sm:$0xff]
    %v672 = vld [vmem:[#allocation2 + $0x608] sm:$0xff]
    %v673 = vld [vmem:[#allocation2 + $0x610] sm:$0xff]
    %v674 = vld [vmem:[#allocation2 + $0x618] sm:$0xff]
    %v675 = vld [vmem:[#allocation2 + $0x620] sm:$0xff]
    %v676 = vld [vmem:[#allocation2 + $0x628] sm:$0xff]
    %v677 = vld [vmem:[#allocation2 + $0x630] sm:$0xff]
    %v678 = vld [vmem:[#allocation2 + $0x638] sm:$0xff]
    %v679 = vld [vmem:[#allocation2 + $0x640] sm:$0xff]
    %v680 = vld [vmem:[#allocation2 + $0x648] sm:$0xff]
    %v681 = vld [vmem:[#allocation2 + $0x650] sm:$0xff]
    %v682 = vld [vmem:[#allocation2 + $0x658] sm:$0xff]
    %v683 = vld [vmem:[#allocation2 + $0x660] sm:$0xff]
    %v684 = vld [vmem:[#allocation2 + $0x668] sm:$0xff]
    %v685 = vld [vmem:[#allocation2 + $0x670] sm:$0xff]
    %v686 = vld [vmem:[#allocation2 + $0x678] sm:$0xff]
    %v687 = vld [vmem:[#allocation2 + $0x680] sm:$0xff]
    %v688 = vld [vmem:[#allocation2 + $0x688] sm:$0xff]
    %v689 = vld [vmem:[#allocation2 + $0x690] sm:$0xff]
    %v690 = vld [vmem:[#allocation2 + $0x698] sm:$0xff]
    %v691 = vld [vmem:[#allocation2 + $0x6a0] sm:$0xff]
    %v692 = vld [vmem:[#allocation2 + $0x6a8] sm:$0xff]
    %v693 = vld [vmem:[#allocation2 + $0x6b0] sm:$0xff]
    %v694 = vld [vmem:[#allocation2 + $0x6b8] sm:$0xff]
    %v695 = vld [vmem:[#allocation2 + $0x6c0] sm:$0xff]
    %v696 = vld [vmem:[#allocation2 + $0x6c8] sm:$0xff]
    %v697 = vld [vmem:[#allocation2 + $0x6d0] sm:$0xff]
    %v698 = vld [vmem:[#allocation2 + $0x6d8] sm:$0xff]
    %v699 = vld [vmem:[#allocation2 + $0x6e0] sm:$0xff]
    %v700 = vld [vmem:[#allocation2 + $0x6e8] sm:$0xff]
    %v701 = vld [vmem:[#allocation2 + $0x6f0] sm:$0xff]
    %v702 = vld [vmem:[#allocation2 + $0x6f8] sm:$0xff]
    %v703 = vld [vmem:[#allocation2 + $0x700] sm:$0xff]
    %v704 = vld [vmem:[#allocation2 + $0x708] sm:$0xff]
    %v705 = vld [vmem:[#allocation2 + $0x710] sm:$0xff]
    %v706 = vld [vmem:[#allocation2 + $0x718] sm:$0xff]
    %v707 = vld [vmem:[#allocation2 + $0x720] sm:$0xff]
    %v708 = vld [vmem:[#allocation2 + $0x728] sm:$0xff]
    %v709 = vld [vmem:[#allocation2 + $0x730] sm:$0xff]
    %v710 = vld [vmem:[#allocation2 + $0x738] sm:$0xff]
    %v711 = vld [vmem:[#allocation2 + $0x740] sm:$0xff]
    %v712 = vld [vmem:[#allocation2 + $0x748] sm:$0xff]
    %v713 = vld [vmem:[#allocation2 + $0x750] sm:$0xff]
    %v714 = vld [vmem:[#allocation2 + $0x758] sm:$0xff]
    %v715 = vld [vmem:[#allocation2 + $0x760] sm:$0xff]
    %v716 = vld [vmem:[#allocation2 + $0x768] sm:$0xff]
    %v717 = vld [vmem:[#allocation2 + $0x770] sm:$0xff]
    %v718 = vld [vmem:[#allocation2 + $0x778] sm:$0xff]
    %v719 = vld [vmem:[#allocation2 + $0x780] sm:$0xff]
    %v720 = vld [vmem:[#allocation2 + $0x788] sm:$0xff]
    %v721 = vld [vmem:[#allocation2 + $0x790] sm:$0xff]
    %v722 = vld [vmem:[#allocation2 + $0x798] sm:$0xff]
    %v723 = vld [vmem:[#allocation2 + $0x7a0] sm:$0xff]
    %v724 = vld [vmem:[#allocation2 + $0x7a8] sm:$0xff]
    %v725 = vld [vmem:[#allocation2 + $0x7b0] sm:$0xff]
    %v726 = vld [vmem:[#allocation2 + $0x7b8] sm:$0xff]
    %v727 = vld [vmem:[%s4] sm:$0x3]
    %v729 = vlaneseq
    %v730 = vshrl.u32 %v729, 7
    %v731 = vsub.s32 0, %v730
    %v732 = vrot.slane %v727, %v731
    %v733 = vlaneseq
    %v734 = vshrl.u32 %v733, 7
    %v735 = vsub.s32 1, %v734
    %v736 = vrot.slane %v727, %v735
    %vm739 = vcmask 785408
    %v741 = vsel %vm739, %v478, 0
    %743 = vmatprep.subr.mxu0 %v480
    %744 = vmatpush1.msra.mxu0 %v479
    %745 = vmatprep.subr.mxu0 %v482
    %746 = vmatpush1.msra.mxu0 %v481
    %747 = vmatprep.subr.mxu0 %v484
    %748 = vmatpush1.msra.mxu0 %v483
    %749 = vmatprep.subr.mxu0 %v486
    %750 = vmatpush1.msra.mxu0 %v485
    %751 = vmatprep.subr.mxu0 %v488
    %752 = vmatpush1.msra.mxu0 %v487
    %753 = vmatprep.subr.mxu0 %v490
    %754 = vmatpush1.msra.mxu0 %v489
    %755 = vmatprep.subr.mxu0 %v492
    %756 = vmatpush1.msra.mxu0 %v491
    %757 = vmatprep.subr.mxu0 %v494
    %758 = vmatpush1.msra.mxu0 %v493
    %759 = vmatprep.subr.mxu0 %v496
    %760 = vmatpush1.msra.mxu0 %v495
    %761 = vmatprep.subr.mxu0 %v498
    %762 = vmatpush1.msra.mxu0 %v497
    %763 = vmatprep.subr.mxu0 %v500
    %764 = vmatpush1.msra.mxu0 %v499
    %765 = vmatprep.subr.mxu0 %v502
    %766 = vmatpush1.msra.mxu0 %v501
    %767 = vmatprep.subr.mxu0 %v504
    %768 = vmatpush1.msra.mxu0 %v503
    %769 = vmatprep.subr.mxu0 %v506
    %770 = vmatpush1.msra.mxu0 %v505
    %771 = vmatprep.subr.mxu0 %v508
    %772 = vmatpush1.msra.mxu0 %v507
    %773 = vmatprep.subr.mxu0 %v510
    %774 = vmatpush1.msra.mxu0 %v509
    %775 = vmatprep.subr.mxu0 %v512
    %776 = vmatpush1.msra.mxu0 %v511
    %777 = vmatprep.subr.mxu0 %v514
    %778 = vmatpush1.msra.mxu0 %v513
    %779 = vmatprep.subr.mxu0 %v516
    %780 = vmatpush1.msra.mxu0 %v515
    %781 = vmatprep.subr.mxu0 %v518
    %782 = vmatpush1.msra.mxu0 %v517
    %783 = vmatprep.subr.mxu0 %v520
    %784 = vmatpush1.msra.mxu0 %v519
    %785 = vmatprep.subr.mxu0 %v522
    %786 = vmatpush1.msra.mxu0 %v521
    %787 = vmatprep.subr.mxu0 %v524
    %788 = vmatpush1.msra.mxu0 %v523
    %789 = vmatprep.subr.mxu0 %v526
    %790 = vmatpush1.msra.mxu0 %v525
    %791 = vmatprep.subr.mxu0 %v528
    %792 = vmatpush1.msra.mxu0 %v527
    %793 = vmatprep.subr.mxu0 %v530
    %794 = vmatpush1.msra.mxu0 %v529
    %795 = vmatprep.subr.mxu0 %v532
    %796 = vmatpush1.msra.mxu0 %v531
    %797 = vmatprep.subr.mxu0 %v534
    %798 = vmatpush1.msra.mxu0 %v533
    %799 = vmatprep.subr.mxu0 %v536
    %800 = vmatpush1.msra.mxu0 %v535
    %801 = vmatprep.subr.mxu0 %v538
    %802 = vmatpush1.msra.mxu0 %v537
    %803 = vmatprep.subr.mxu0 %v540
    %804 = vmatpush1.msra.mxu0 %v539
    %805 = vmatprep.subr.mxu0 %v542
    %806 = vmatpush1.msra.mxu0 %v541
    %807 = vmatprep.mubr.f32.mxu0 %v472
    %808 = vmatmul.mubr.f32.gmra.mrb[0].mxu0 %v471
    %v809 = vpop.f32.mrb[0].mxu0
    %v810 = vadd.f32 %v732, %v809
    %v811 = vpop.f32.mrb[0].mxu0
    %v812 = vadd.f32 %v736, %v811
    %813 = vdwg.mxu0
    %814 = vmatprep.subr.mxu0 %v544
    %815 = vmatpush1.msra.mxu0 %v543
    %816 = vmatprep.subr.mxu0 %v546
    %817 = vmatpush1.msra.mxu0 %v545
    %818 = vmatprep.subr.mxu0 %v548
    %819 = vmatpush1.msra.mxu0 %v547
    %820 = vmatprep.subr.mxu0 %v550
    %821 = vmatpush1.msra.mxu0 %v549
    %822 = vmatprep.subr.mxu0 %v552
    %823 = vmatpush1.msra.mxu0 %v551
    %824 = vmatprep.subr.mxu0 %v554
    %825 = vmatpush1.msra.mxu0 %v553
    %826 = vmatprep.subr.mxu0 %v556
    %827 = vmatpush1.msra.mxu0 %v555
    %828 = vmatprep.subr.mxu0 %v558
    %829 = vmatpush1.msra.mxu0 %v557
    %830 = vmatprep.subr.mxu0 %v560
    %831 = vmatpush1.msra.mxu0 %v559
    %832 = vmatprep.subr.mxu0 %v562
    %833 = vmatpush1.msra.mxu0 %v561
    %834 = vmatprep.subr.mxu0 %v564
    %835 = vmatpush1.msra.mxu0 %v563
    %836 = vmatprep.subr.mxu0 %v566
    %837 = vmatpush1.msra.mxu0 %v565
    %838 = vmatprep.subr.mxu0 %v568
    %839 = vmatpush1.msra.mxu0 %v567
    %840 = vmatprep.subr.mxu0 %v570
    %841 = vmatpush1.msra.mxu0 %v569
    %842 = vmatprep.subr.mxu0 %v572
    %843 = vmatpush1.msra.mxu0 %v571
    %844 = vmatprep.subr.mxu0 %v574
    %845 = vmatpush1.msra.mxu0 %v573
    %846 = vmatprep.subr.mxu0 %v576
    %847 = vmatpush1.msra.mxu0 %v575
    %848 = vmatprep.subr.mxu0 %v578
    %849 = vmatpush1.msra.mxu0 %v577
    %850 = vmatprep.subr.mxu0 %v580
    %851 = vmatpush1.msra.mxu0 %v579
    %852 = vmatprep.subr.mxu0 %v582
    %853 = vmatpush1.msra.mxu0 %v581
    %854 = vmatprep.subr.mxu0 %v584
    %855 = vmatpush1.msra.mxu0 %v583
    %856 = vmatprep.subr.mxu0 %v586
    %857 = vmatpush1.msra.mxu0 %v585
    %858 = vmatprep.subr.mxu0 %v588
    %859 = vmatpush1.msra.mxu0 %v587
    %860 = vmatprep.subr.mxu0 %v590
    %861 = vmatpush1.msra.mxu0 %v589
    %862 = vmatprep.subr.mxu0 %v592
    %863 = vmatpush1.msra.mxu0 %v591
    %864 = vmatprep.subr.mxu0 %v594
    %865 = vmatpush1.msra.mxu0 %v593
    %866 = vmatprep.subr.mxu0 %v596
    %867 = vmatpush1.msra.mxu0 %v595
    %868 = vmatprep.subr.mxu0 %v598
    %869 = vmatpush1.msra.mxu0 %v597
    %870 = vmatprep.subr.mxu0 %v600
    %871 = vmatpush1.msra.mxu0 %v599
    %872 = vmatprep.subr.mxu0 %v602
    %873 = vmatpush1.msra.mxu0 %v601
    %874 = vmatprep.subr.mxu0 %v604
    %875 = vmatpush1.msra.mxu0 %v603
    %876 = vmatprep.subr.mxu0 %v606
    %877 = vmatpush1.msra.mxu0 %v605
    %878 = vmatprep.mubr.f32.mxu0 %v474
    %879 = vmatmul.mubr.f32.gmra.mrb[0].mxu0 %v473
    %v880 = vpop.f32.mrb[0].mxu0
    %v881 = vadd.f32 %v810, %v880
    %v882 = vpop.f32.mrb[0].mxu0
    %v883 = vadd.f32 %v812, %v882
    %884 = vdwg.mxu0
    %885 = vmatprep.subr.mxu0 %v608
    %886 = vmatpush1.msra.mxu0 %v607
    %887 = vmatprep.subr.mxu0 %v610
    %888 = vmatpush1.msra.mxu0 %v609
    %889 = vmatprep.subr.mxu0 %v612
    %890 = vmatpush1.msra.mxu0 %v611
    %891 = vmatprep.subr.mxu0 %v614
    %892 = vmatpush1.msra.mxu0 %v613
    %893 = vmatprep.subr.mxu0 %v616
    %894 = vmatpush1.msra.mxu0 %v615
    %895 = vmatprep.subr.mxu0 %v618
    %896 = vmatpush1.msra.mxu0 %v617
    %897 = vmatprep.subr.mxu0 %v620
    %898 = vmatpush1.msra.mxu0 %v619
    %899 = vmatprep.subr.mxu0 %v622
    %900 = vmatpush1.msra.mxu0 %v621
    %901 = vmatprep.subr.mxu0 %v624
    %902 = vmatpush1.msra.mxu0 %v623
    %903 = vmatprep.subr.mxu0 %v626
    %904 = vmatpush1.msra.mxu0 %v625
    %905 = vmatprep.subr.mxu0 %v628
    %906 = vmatpush1.msra.mxu0 %v627
    %907 = vmatprep.subr.mxu0 %v630
    %908 = vmatpush1.msra.mxu0 %v629
    %909 = vmatprep.subr.mxu0 %v632
    %910 = vmatpush1.msra.mxu0 %v631
    %911 = vmatprep.subr.mxu0 %v634
    %912 = vmatpush1.msra.mxu0 %v633
    %913 = vmatprep.subr.mxu0 %v636
    %914 = vmatpush1.msra.mxu0 %v635
    %915 = vmatprep.subr.mxu0 %v638
    %916 = vmatpush1.msra.mxu0 %v637
    %917 = vmatprep.subr.mxu0 %v640
    %918 = vmatpush1.msra.mxu0 %v639
    %919 = vmatprep.subr.mxu0 %v642
    %920 = vmatpush1.msra.mxu0 %v641
    %921 = vmatprep.subr.mxu0 %v644
    %922 = vmatpush1.msra.mxu0 %v643
    %923 = vmatprep.subr.mxu0 %v646
    %924 = vmatpush1.msra.mxu0 %v645
    %925 = vmatprep.subr.mxu0 %v648
    %926 = vmatpush1.msra.mxu0 %v647
    %927 = vmatprep.subr.mxu0 %v650
    %928 = vmatpush1.msra.mxu0 %v649
    %929 = vmatprep.subr.mxu0 %v652
    %930 = vmatpush1.msra.mxu0 %v651
    %931 = vmatprep.subr.mxu0 %v654
    %932 = vmatpush1.msra.mxu0 %v653
    %933 = vmatprep.subr.mxu0 %v656
    %934 = vmatpush1.msra.mxu0 %v655
    %935 = vmatprep.subr.mxu0 %v658
    %936 = vmatpush1.msra.mxu0 %v657
    %937 = vmatprep.subr.mxu0 %v660
    %938 = vmatpush1.msra.mxu0 %v659
    %939 = vmatprep.subr.mxu0 %v662
    %940 = vmatpush1.msra.mxu0 %v661
    %941 = vmatprep.subr.mxu0 %v664
    %942 = vmatpush1.msra.mxu0 %v663
    %943 = vmatprep.subr.mxu0 %v666
    %944 = vmatpush1.msra.mxu0 %v665
    %945 = vmatprep.subr.mxu0 %v668
    %946 = vmatpush1.msra.mxu0 %v667
    %947 = vmatprep.subr.mxu0 %v670
    %948 = vmatpush1.msra.mxu0 %v669
    %949 = vmatprep.mubr.f32.mxu0 %v476
    %950 = vmatmul.mubr.f32.gmra.mrb[0].mxu0 %v475
    %v951 = vpop.f32.mrb[0].mxu0
    %v952 = vadd.f32 %v881, %v951
    %v953 = vpop.f32.mrb[0].mxu0
    %v954 = vadd.f32 %v883, %v953
    %955 = vdwg.mxu0
    %956 = vmatprep.subr.mxu0 %v672
    %957 = vmatpush1.msra.mxu0 %v671
    %958 = vmatprep.subr.mxu0 %v674
    %959 = vmatpush1.msra.mxu0 %v673
    %960 = vmatprep.subr.mxu0 %v676
    %961 = vmatpush1.msra.mxu0 %v675
    %962 = vmatprep.subr.mxu0 %v678
    %963 = vmatpush1.msra.mxu0 %v677
    %964 = vmatprep.subr.mxu0 %v680
    %965 = vmatpush1.msra.mxu0 %v679
    %966 = vmatprep.subr.mxu0 %v682
    %967 = vmatpush1.msra.mxu0 %v681
    %968 = vmatprep.subr.mxu0 %v684
    %969 = vmatpush1.msra.mxu0 %v683
    %970 = vmatprep.subr.mxu0 %v686
    %971 = vmatpush1.msra.mxu0 %v685
    %972 = vmatprep.subr.mxu0 %v688
    %973 = vmatpush1.msra.mxu0 %v687
    %974 = vmatprep.subr.mxu0 %v690
    %975 = vmatpush1.msra.mxu0 %v689
    %976 = vmatprep.subr.mxu0 %v692
    %977 = vmatpush1.msra.mxu0 %v691
    %978 = vmatprep.subr.mxu0 %v694
    %979 = vmatpush1.msra.mxu0 %v693
    %980 = vmatprep.subr.mxu0 %v696
    %981 = vmatpush1.msra.mxu0 %v695
    %982 = vmatprep.subr.mxu0 %v698
    %983 = vmatpush1.msra.mxu0 %v697
    %984 = vmatprep.subr.mxu0 %v700
    %985 = vmatpush1.msra.mxu0 %v699
    %986 = vmatprep.subr.mxu0 %v702
    %987 = vmatpush1.msra.mxu0 %v701
    %988 = vmatprep.subr.mxu0 %v704
    %989 = vmatpush1.msra.mxu0 %v703
    %990 = vmatprep.subr.mxu0 %v706
    %991 = vmatpush1.msra.mxu0 %v705
    %992 = vmatprep.subr.mxu0 %v708
    %993 = vmatpush1.msra.mxu0 %v707
    %994 = vmatprep.subr.mxu0 %v710
    %995 = vmatpush1.msra.mxu0 %v709
    %996 = vmatprep.subr.mxu0 %v712
    %997 = vmatpush1.msra.mxu0 %v711
    %998 = vmatprep.subr.mxu0 %v714
    %999 = vmatpush1.msra.mxu0 %v713
    %1000 = vmatprep.subr.mxu0 %v716
    %1001 = vmatpush1.msra.mxu0 %v715
    %1002 = vmatprep.subr.mxu0 %v718
    %1003 = vmatpush1.msra.mxu0 %v717
    %1004 = vmatprep.subr.mxu0 %v720
    %1005 = vmatpush1.msra.mxu0 %v719
    %1006 = vmatprep.subr.mxu0 %v722
    %1007 = vmatpush1.msra.mxu0 %v721
    %1008 = vmatprep.subr.mxu0 %v724
    %1009 = vmatpush1.msra.mxu0 %v723
    %1010 = vmatprep.subr.mxu0 %v726
    %1011 = vmatpush1.msra.mxu0 %v725
    %1012 = vmatprep.subr.mxu0 0.0
    %1013 = vmatpush1.msra.mxu0 0.0
    %1014 = vmatprep.subr.mxu0 0.0
    %1015 = vmatpush1.msra.mxu0 0.0
    %1016 = vmatprep.subr.mxu0 0.0
    %1017 = vmatpush1.msra.mxu0 0.0
    %1018 = vmatprep.subr.mxu0 0.0
    %1019 = vmatpush1.msra.mxu0 0.0
    %1020 = vmatprep.mubr.f32.mxu0 %v741
    %1021 = vmatmul.mubr.f32.gmra.mrb[0].mxu0 %v477
    %v1022 = vpop.f32.mrb[0].mxu0
    %v1023 = vadd.f32 %v952, %v1022
    %v1024 = vpop.f32.mrb[0].mxu0
    %v1025 = vadd.f32 %v954, %v1024
    %1026 = vdwg.mxu0
    %vm1027 = vcmp.ge.f32.partialorder %v1023, 0.0
    %vm1028 = vcmp.ge.f32.partialorder %v1025, 0.0
    %v1029 = vmul.f32 %v1023, 0.2
    %v1030 = vmul.f32 %v1025, 0.2
    %v1031 = vsel %vm1027, %v1023, %v1029
    %v1032 = vsel %vm1028, %v1025, %v1030
    %v1033 = vld [vmem:[#allocation4] sm:$0xff]
    %v1034 = vld [vmem:[#allocation4 + $0x8] sm:$0xff]
    %v1035 = vld [vmem:[#allocation4 + $0x10] sm:$0xff]
    %v1036 = vld [vmem:[#allocation4 + $0x18] sm:$0xff]
    %v1037 = vld [vmem:[#allocation4 + $0x20] sm:$0xff]
    %v1038 = vld [vmem:[#allocation4 + $0x28] sm:$0xff]
    %v1039 = vld [vmem:[#allocation4 + $0x30] sm:$0xff]
    %v1040 = vld [vmem:[#allocation4 + $0x38] sm:$0xff]
    %v1041 = vld [vmem:[#allocation4 + $0x40] sm:$0xff]
    %v1042 = vld [vmem:[#allocation4 + $0x48] sm:$0xff]
    %v1043 = vld [vmem:[#allocation4 + $0x50] sm:$0xff]
    %v1044 = vld [vmem:[#allocation4 + $0x58] sm:$0xff]
    %v1045 = vld [vmem:[#allocation4 + $0x60] sm:$0xff]
    %v1046 = vld [vmem:[#allocation4 + $0x68] sm:$0xff]
    %v1047 = vld [vmem:[#allocation4 + $0x70] sm:$0xff]
    %v1048 = vld [vmem:[#allocation4 + $0x78] sm:$0xff]
    %v1049 = vld [vmem:[#allocation4 + $0x80] sm:$0xff]
    %v1050 = vld [vmem:[#allocation4 + $0x88] sm:$0xff]
    %v1051 = vld [vmem:[#allocation4 + $0x90] sm:$0xff]
    %v1052 = vld [vmem:[#allocation4 + $0x98] sm:$0xff]
    %v1053 = vld [vmem:[#allocation4 + $0xa0] sm:$0xff]
    %v1054 = vld [vmem:[#allocation4 + $0xa8] sm:$0xff]
    %v1055 = vld [vmem:[#allocation4 + $0xb0] sm:$0xff]
    %v1056 = vld [vmem:[#allocation4 + $0xb8] sm:$0xff]
    %v1057 = vld [vmem:[#allocation4 + $0xc0] sm:$0xff]
    %v1058 = vld [vmem:[#allocation4 + $0xc8] sm:$0xff]
    %v1059 = vld [vmem:[#allocation4 + $0xd0] sm:$0xff]
    %v1060 = vld [vmem:[#allocation4 + $0xd8] sm:$0xff]
    %v1061 = vld [vmem:[#allocation4 + $0xe0] sm:$0xff]
    %v1062 = vld [vmem:[#allocation4 + $0xe8] sm:$0xff]
    %v1063 = vld [vmem:[#allocation4 + $0xf0] sm:$0xff]
    %v1064 = vld [vmem:[#allocation4 + $0xf8] sm:$0xff]
    %v1065 = vld [vmem:[#allocation4 + $0x100] sm:$0xff]
    %v1066 = vld [vmem:[#allocation4 + $0x108] sm:$0xff]
    %v1067 = vld [vmem:[#allocation4 + $0x110] sm:$0xff]
    %v1068 = vld [vmem:[#allocation4 + $0x118] sm:$0xff]
    %v1069 = vld [vmem:[#allocation4 + $0x120] sm:$0xff]
    %v1070 = vld [vmem:[#allocation4 + $0x128] sm:$0xff]
    %v1071 = vld [vmem:[#allocation4 + $0x130] sm:$0xff]
    %v1072 = vld [vmem:[#allocation4 + $0x138] sm:$0xff]
    %v1073 = vld [vmem:[#allocation4 + $0x140] sm:$0xff]
    %v1074 = vld [vmem:[#allocation4 + $0x148] sm:$0xff]
    %v1075 = vld [vmem:[#allocation4 + $0x150] sm:$0xff]
    %v1076 = vld [vmem:[#allocation4 + $0x158] sm:$0xff]
    %v1077 = vld [vmem:[#allocation4 + $0x160] sm:$0xff]
    %v1078 = vld [vmem:[#allocation4 + $0x168] sm:$0xff]
    %v1079 = vld [vmem:[#allocation4 + $0x170] sm:$0xff]
    %v1080 = vld [vmem:[#allocation4 + $0x178] sm:$0xff]
    %v1081 = vld [vmem:[#allocation4 + $0x180] sm:$0xff]
    %v1082 = vld [vmem:[#allocation4 + $0x188] sm:$0xff]
    %v1083 = vld [vmem:[#allocation4 + $0x190] sm:$0xff]
    %v1084 = vld [vmem:[#allocation4 + $0x198] sm:$0xff]
    %v1085 = vld [vmem:[#allocation4 + $0x1a0] sm:$0xff]
    %v1086 = vld [vmem:[#allocation4 + $0x1a8] sm:$0xff]
    %v1087 = vld [vmem:[#allocation4 + $0x1b0] sm:$0xff]
    %v1088 = vld [vmem:[#allocation4 + $0x1b8] sm:$0xff]
    %v1089 = vld [vmem:[#allocation4 + $0x1c0] sm:$0xff]
    %v1090 = vld [vmem:[#allocation4 + $0x1c8] sm:$0xff]
    %v1091 = vld [vmem:[#allocation4 + $0x1d0] sm:$0xff]
    %v1092 = vld [vmem:[#allocation4 + $0x1d8] sm:$0xff]
    %v1093 = vld [vmem:[#allocation4 + $0x1e0] sm:$0xff]
    %v1094 = vld [vmem:[#allocation4 + $0x1e8] sm:$0xff]
    %v1095 = vld [vmem:[#allocation4 + $0x1f0] sm:$0xff]
    %v1096 = vld [vmem:[#allocation4 + $0x1f8] sm:$0xff]
    %v1097 = vld [vmem:[#allocation4 + $0x200] sm:$0xff]
    %v1098 = vld [vmem:[#allocation4 + $0x208] sm:$0xff]
    %v1099 = vld [vmem:[#allocation4 + $0x210] sm:$0xff]
    %v1100 = vld [vmem:[#allocation4 + $0x218] sm:$0xff]
    %v1101 = vld [vmem:[#allocation4 + $0x220] sm:$0xff]
    %v1102 = vld [vmem:[#allocation4 + $0x228] sm:$0xff]
    %v1103 = vld [vmem:[#allocation4 + $0x230] sm:$0xff]
    %v1104 = vld [vmem:[#allocation4 + $0x238] sm:$0xff]
    %v1105 = vld [vmem:[#allocation4 + $0x240] sm:$0xff]
    %v1106 = vld [vmem:[#allocation4 + $0x248] sm:$0xff]
    %v1107 = vld [vmem:[#allocation4 + $0x250] sm:$0xff]
    %v1108 = vld [vmem:[#allocation4 + $0x258] sm:$0xff]
    %v1109 = vld [vmem:[#allocation4 + $0x260] sm:$0xff]
    %v1110 = vld [vmem:[#allocation4 + $0x268] sm:$0xff]
    %v1111 = vld [vmem:[#allocation4 + $0x270] sm:$0xff]
    %v1112 = vld [vmem:[#allocation4 + $0x278] sm:$0xff]
    %v1113 = vld [vmem:[#allocation4 + $0x280] sm:$0xff]
    %v1114 = vld [vmem:[#allocation4 + $0x288] sm:$0xff]
    %v1115 = vld [vmem:[#allocation4 + $0x290] sm:$0xff]
    %v1116 = vld [vmem:[#allocation4 + $0x298] sm:$0xff]
    %v1117 = vld [vmem:[#allocation4 + $0x2a0] sm:$0xff]
    %v1118 = vld [vmem:[#allocation4 + $0x2a8] sm:$0xff]
    %v1119 = vld [vmem:[#allocation4 + $0x2b0] sm:$0xff]
    %v1120 = vld [vmem:[#allocation4 + $0x2b8] sm:$0xff]
    %v1121 = vld [vmem:[#allocation4 + $0x2c0] sm:$0xff]
    %v1122 = vld [vmem:[#allocation4 + $0x2c8] sm:$0xff]
    %v1123 = vld [vmem:[#allocation4 + $0x2d0] sm:$0xff]
    %v1124 = vld [vmem:[#allocation4 + $0x2d8] sm:$0xff]
    %v1125 = vld [vmem:[#allocation4 + $0x2e0] sm:$0xff]
    %v1126 = vld [vmem:[#allocation4 + $0x2e8] sm:$0xff]
    %v1127 = vld [vmem:[#allocation4 + $0x2f0] sm:$0xff]
    %v1128 = vld [vmem:[#allocation4 + $0x2f8] sm:$0xff]
    %v1129 = vld [vmem:[#allocation4 + $0x300] sm:$0xff]
    %v1130 = vld [vmem:[#allocation4 + $0x308] sm:$0xff]
    %v1131 = vld [vmem:[#allocation4 + $0x310] sm:$0xff]
    %v1132 = vld [vmem:[#allocation4 + $0x318] sm:$0xff]
    %v1133 = vld [vmem:[#allocation4 + $0x320] sm:$0xff]
    %v1134 = vld [vmem:[#allocation4 + $0x328] sm:$0xff]
    %v1135 = vld [vmem:[#allocation4 + $0x330] sm:$0xff]
    %v1136 = vld [vmem:[#allocation4 + $0x338] sm:$0xff]
    %v1137 = vld [vmem:[#allocation4 + $0x340] sm:$0xff]
    %v1138 = vld [vmem:[#allocation4 + $0x348] sm:$0xff]
    %v1139 = vld [vmem:[#allocation4 + $0x350] sm:$0xff]
    %v1140 = vld [vmem:[#allocation4 + $0x358] sm:$0xff]
    %v1141 = vld [vmem:[#allocation4 + $0x360] sm:$0xff]
    %v1142 = vld [vmem:[#allocation4 + $0x368] sm:$0xff]
    %v1143 = vld [vmem:[#allocation4 + $0x370] sm:$0xff]
    %v1144 = vld [vmem:[#allocation4 + $0x378] sm:$0xff]
    %v1145 = vld [vmem:[#allocation4 + $0x380] sm:$0xff]
    %v1146 = vld [vmem:[#allocation4 + $0x388] sm:$0xff]
    %v1147 = vld [vmem:[#allocation4 + $0x390] sm:$0xff]
    %v1148 = vld [vmem:[#allocation4 + $0x398] sm:$0xff]
    %v1149 = vld [vmem:[#allocation4 + $0x3a0] sm:$0xff]
    %v1150 = vld [vmem:[#allocation4 + $0x3a8] sm:$0xff]
    %v1151 = vld [vmem:[#allocation4 + $0x3b0] sm:$0xff]
    %v1152 = vld [vmem:[#allocation4 + $0x3b8] sm:$0xff]
    %v1153 = vld [vmem:[#allocation4 + $0x3c0] sm:$0xff]
    %v1154 = vld [vmem:[#allocation4 + $0x3c8] sm:$0xff]
    %v1155 = vld [vmem:[#allocation4 + $0x3d0] sm:$0xff]
    %v1156 = vld [vmem:[#allocation4 + $0x3d8] sm:$0xff]
    %v1157 = vld [vmem:[#allocation4 + $0x3e0] sm:$0xff]
    %v1158 = vld [vmem:[#allocation4 + $0x3e8] sm:$0xff]
    %v1159 = vld [vmem:[#allocation4 + $0x3f0] sm:$0xff]
    %v1160 = vld [vmem:[#allocation4 + $0x3f8] sm:$0xff]
    %v1161 = vld [vmem:[#allocation4 + $0x400] sm:$0xff]
    %v1162 = vld [vmem:[#allocation4 + $0x408] sm:$0xff]
    %v1163 = vld [vmem:[#allocation4 + $0x410] sm:$0xff]
    %v1164 = vld [vmem:[#allocation4 + $0x418] sm:$0xff]
    %v1165 = vld [vmem:[#allocation4 + $0x420] sm:$0xff]
    %v1166 = vld [vmem:[#allocation4 + $0x428] sm:$0xff]
    %v1167 = vld [vmem:[#allocation4 + $0x430] sm:$0xff]
    %v1168 = vld [vmem:[#allocation4 + $0x438] sm:$0xff]
    %v1169 = vld [vmem:[#allocation4 + $0x440] sm:$0xff]
    %v1170 = vld [vmem:[#allocation4 + $0x448] sm:$0xff]
    %v1171 = vld [vmem:[#allocation4 + $0x450] sm:$0xff]
    %v1172 = vld [vmem:[#allocation4 + $0x458] sm:$0xff]
    %v1173 = vld [vmem:[#allocation4 + $0x460] sm:$0xff]
    %v1174 = vld [vmem:[#allocation4 + $0x468] sm:$0xff]
    %v1175 = vld [vmem:[#allocation4 + $0x470] sm:$0xff]
    %v1176 = vld [vmem:[#allocation4 + $0x478] sm:$0xff]
    %v1177 = vld [vmem:[#allocation4 + $0x480] sm:$0xff]
    %v1178 = vld [vmem:[#allocation4 + $0x488] sm:$0xff]
    %v1179 = vld [vmem:[#allocation4 + $0x490] sm:$0xff]
    %v1180 = vld [vmem:[#allocation4 + $0x498] sm:$0xff]
    %v1181 = vld [vmem:[#allocation4 + $0x4a0] sm:$0xff]
    %v1182 = vld [vmem:[#allocation4 + $0x4a8] sm:$0xff]
    %v1183 = vld [vmem:[#allocation4 + $0x4b0] sm:$0xff]
    %v1184 = vld [vmem:[#allocation4 + $0x4b8] sm:$0xff]
    %v1185 = vld [vmem:[#allocation4 + $0x4c0] sm:$0xff]
    %v1186 = vld [vmem:[#allocation4 + $0x4c8] sm:$0xff]
    %v1187 = vld [vmem:[#allocation4 + $0x4d0] sm:$0xff]
    %v1188 = vld [vmem:[#allocation4 + $0x4d8] sm:$0xff]
    %v1189 = vld [vmem:[#allocation4 + $0x4e0] sm:$0xff]
    %v1190 = vld [vmem:[#allocation4 + $0x4e8] sm:$0xff]
    %v1191 = vld [vmem:[#allocation4 + $0x4f0] sm:$0xff]
    %v1192 = vld [vmem:[#allocation4 + $0x4f8] sm:$0xff]
    %v1193 = vld [vmem:[#allocation4 + $0x500] sm:$0xff]
    %v1194 = vld [vmem:[#allocation4 + $0x508] sm:$0xff]
    %v1195 = vld [vmem:[#allocation4 + $0x510] sm:$0xff]
    %v1196 = vld [vmem:[#allocation4 + $0x518] sm:$0xff]
    %v1197 = vld [vmem:[#allocation4 + $0x520] sm:$0xff]
    %v1198 = vld [vmem:[#allocation4 + $0x528] sm:$0xff]
    %v1199 = vld [vmem:[#allocation4 + $0x530] sm:$0xff]
    %v1200 = vld [vmem:[#allocation4 + $0x538] sm:$0xff]
    %v1201 = vld [vmem:[#allocation4 + $0x540] sm:$0xff]
    %v1202 = vld [vmem:[#allocation4 + $0x548] sm:$0xff]
    %v1203 = vld [vmem:[#allocation4 + $0x550] sm:$0xff]
    %v1204 = vld [vmem:[#allocation4 + $0x558] sm:$0xff]
    %v1205 = vld [vmem:[#allocation4 + $0x560] sm:$0xff]
    %v1206 = vld [vmem:[#allocation4 + $0x568] sm:$0xff]
    %v1207 = vld [vmem:[#allocation4 + $0x570] sm:$0xff]
    %v1208 = vld [vmem:[#allocation4 + $0x578] sm:$0xff]
    %v1209 = vld [vmem:[#allocation4 + $0x580] sm:$0xff]
    %v1210 = vld [vmem:[#allocation4 + $0x588] sm:$0xff]
    %v1211 = vld [vmem:[#allocation4 + $0x590] sm:$0xff]
    %v1212 = vld [vmem:[#allocation4 + $0x598] sm:$0xff]
    %v1213 = vld [vmem:[#allocation4 + $0x5a0] sm:$0xff]
    %v1214 = vld [vmem:[#allocation4 + $0x5a8] sm:$0xff]
    %v1215 = vld [vmem:[#allocation4 + $0x5b0] sm:$0xff]
    %v1216 = vld [vmem:[#allocation4 + $0x5b8] sm:$0xff]
    %v1217 = vld [vmem:[#allocation4 + $0x5c0] sm:$0xff]
    %v1218 = vld [vmem:[#allocation4 + $0x5c8] sm:$0xff]
    %v1219 = vld [vmem:[#allocation4 + $0x5d0] sm:$0xff]
    %v1220 = vld [vmem:[#allocation4 + $0x5d8] sm:$0xff]
    %v1221 = vld [vmem:[#allocation4 + $0x5e0] sm:$0xff]
    %v1222 = vld [vmem:[#allocation4 + $0x5e8] sm:$0xff]
    %v1223 = vld [vmem:[#allocation4 + $0x5f0] sm:$0xff]
    %v1224 = vld [vmem:[#allocation4 + $0x5f8] sm:$0xff]
    %v1225 = vld [vmem:[#allocation4 + $0x600] sm:$0xff]
    %v1226 = vld [vmem:[#allocation4 + $0x608] sm:$0xff]
    %v1227 = vld [vmem:[#allocation4 + $0x610] sm:$0xff]
    %v1228 = vld [vmem:[#allocation4 + $0x618] sm:$0xff]
    %v1229 = vld [vmem:[#allocation4 + $0x620] sm:$0xff]
    %v1230 = vld [vmem:[#allocation4 + $0x628] sm:$0xff]
    %v1231 = vld [vmem:[#allocation4 + $0x630] sm:$0xff]
    %v1232 = vld [vmem:[#allocation4 + $0x638] sm:$0xff]
    %v1233 = vld [vmem:[#allocation4 + $0x640] sm:$0xff]
    %v1234 = vld [vmem:[#allocation4 + $0x648] sm:$0xff]
    %v1235 = vld [vmem:[#allocation4 + $0x650] sm:$0xff]
    %v1236 = vld [vmem:[#allocation4 + $0x658] sm:$0xff]
    %v1237 = vld [vmem:[#allocation4 + $0x660] sm:$0xff]
    %v1238 = vld [vmem:[#allocation4 + $0x668] sm:$0xff]
    %v1239 = vld [vmem:[#allocation4 + $0x670] sm:$0xff]
    %v1240 = vld [vmem:[#allocation4 + $0x678] sm:$0xff]
    %v1241 = vld [vmem:[#allocation4 + $0x680] sm:$0xff]
    %v1242 = vld [vmem:[#allocation4 + $0x688] sm:$0xff]
    %v1243 = vld [vmem:[#allocation4 + $0x690] sm:$0xff]
    %v1244 = vld [vmem:[#allocation4 + $0x698] sm:$0xff]
    %v1245 = vld [vmem:[#allocation4 + $0x6a0] sm:$0xff]
    %v1246 = vld [vmem:[#allocation4 + $0x6a8] sm:$0xff]
    %v1247 = vld [vmem:[#allocation4 + $0x6b0] sm:$0xff]
    %v1248 = vld [vmem:[#allocation4 + $0x6b8] sm:$0xff]
    %v1249 = vld [vmem:[#allocation4 + $0x6c0] sm:$0xff]
    %v1250 = vld [vmem:[#allocation4 + $0x6c8] sm:$0xff]
    %v1251 = vld [vmem:[#allocation4 + $0x6d0] sm:$0xff]
    %v1252 = vld [vmem:[#allocation4 + $0x6d8] sm:$0xff]
    %v1253 = vld [vmem:[#allocation4 + $0x6e0] sm:$0xff]
    %v1254 = vld [vmem:[#allocation4 + $0x6e8] sm:$0xff]
    %v1255 = vld [vmem:[#allocation4 + $0x6f0] sm:$0xff]
    %v1256 = vld [vmem:[#allocation4 + $0x6f8] sm:$0xff]
    %v1257 = vld [vmem:[#allocation4 + $0x700] sm:$0xff]
    %v1258 = vld [vmem:[#allocation4 + $0x708] sm:$0xff]
    %v1259 = vld [vmem:[#allocation4 + $0x710] sm:$0xff]
    %v1260 = vld [vmem:[#allocation4 + $0x718] sm:$0xff]
    %v1261 = vld [vmem:[#allocation4 + $0x720] sm:$0xff]
    %v1262 = vld [vmem:[#allocation4 + $0x728] sm:$0xff]
    %v1263 = vld [vmem:[#allocation4 + $0x730] sm:$0xff]
    %v1264 = vld [vmem:[#allocation4 + $0x738] sm:$0xff]
    %v1265 = vld [vmem:[#allocation4 + $0x740] sm:$0xff]
    %v1266 = vld [vmem:[#allocation4 + $0x748] sm:$0xff]
    %v1267 = vld [vmem:[#allocation4 + $0x750] sm:$0xff]
    %v1268 = vld [vmem:[#allocation4 + $0x758] sm:$0xff]
    %v1269 = vld [vmem:[#allocation4 + $0x760] sm:$0xff]
    %v1270 = vld [vmem:[#allocation4 + $0x768] sm:$0xff]
    %v1271 = vld [vmem:[#allocation4 + $0x770] sm:$0xff]
    %v1272 = vld [vmem:[#allocation4 + $0x778] sm:$0xff]
    %v1273 = vld [vmem:[#allocation4 + $0x780] sm:$0xff]
    %v1274 = vld [vmem:[#allocation4 + $0x788] sm:$0xff]
    %v1275 = vld [vmem:[#allocation4 + $0x790] sm:$0xff]
    %v1276 = vld [vmem:[#allocation4 + $0x798] sm:$0xff]
    %v1277 = vld [vmem:[#allocation4 + $0x7a0] sm:$0xff]
    %v1278 = vld [vmem:[#allocation4 + $0x7a8] sm:$0xff]
    %v1279 = vld [vmem:[#allocation4 + $0x7b0] sm:$0xff]
    %v1280 = vld [vmem:[#allocation4 + $0x7b8] sm:$0xff]
    %v1281 = vld [vmem:[#allocation4 + $0x7c0] sm:$0xff]
    %v1282 = vld [vmem:[#allocation4 + $0x7c8] sm:$0xff]
    %v1283 = vld [vmem:[#allocation4 + $0x7d0] sm:$0xff]
    %v1284 = vld [vmem:[#allocation4 + $0x7d8] sm:$0xff]
    %v1285 = vld [vmem:[#allocation4 + $0x7e0] sm:$0xff]
    %v1286 = vld [vmem:[#allocation4 + $0x7e8] sm:$0xff]
    %v1287 = vld [vmem:[#allocation4 + $0x7f0] sm:$0xff]
    %v1288 = vld [vmem:[#allocation4 + $0x7f8] sm:$0xff]
    %v1289 = vld [vmem:[%s6] sm:$0xff]
    %v1291 = vlaneseq
    %v1292 = vshrl.u32 %v1291, 7
    %v1293 = vsub.s32 0, %v1292
    %v1294 = vrot.slane %v1289, %v1293
    %v1295 = vlaneseq
    %v1296 = vshrl.u32 %v1295, 7
    %v1297 = vsub.s32 1, %v1296
    %v1298 = vrot.slane %v1289, %v1297
    %v1299 = vlaneseq
    %v1300 = vshrl.u32 %v1299, 7
    %v1301 = vsub.s32 2, %v1300
    %v1302 = vrot.slane %v1289, %v1301
    %v1303 = vlaneseq
    %v1304 = vshrl.u32 %v1303, 7
    %v1305 = vsub.s32 3, %v1304
    %v1306 = vrot.slane %v1289, %v1305
    %v1307 = vlaneseq
    %v1308 = vshrl.u32 %v1307, 7
    %v1309 = vsub.s32 4, %v1308
    %v1310 = vrot.slane %v1289, %v1309
    %v1311 = vlaneseq
    %v1312 = vshrl.u32 %v1311, 7
    %v1313 = vsub.s32 5, %v1312
    %v1314 = vrot.slane %v1289, %v1313
    %v1315 = vlaneseq
    %v1316 = vshrl.u32 %v1315, 7
    %v1317 = vsub.s32 6, %v1316
    %v1318 = vrot.slane %v1289, %v1317
    %v1319 = vlaneseq
    %v1320 = vshrl.u32 %v1319, 7
    %v1321 = vsub.s32 7, %v1320
    %v1322 = vrot.slane %v1289, %v1321
    %1331 = vmatprep.subr.mxu0 %v1034
    %1332 = vmatpush1.msra.mxu0 %v1033
    %1333 = vmatprep.subr.mxu0 %v1042
    %1334 = vmatpush1.msra.mxu0 %v1041
    %1335 = vmatprep.subr.mxu0 %v1050
    %1336 = vmatpush1.msra.mxu0 %v1049
    %1337 = vmatprep.subr.mxu0 %v1058
    %1338 = vmatpush1.msra.mxu0 %v1057
    %1339 = vmatprep.subr.mxu0 %v1066
    %1340 = vmatpush1.msra.mxu0 %v1065
    %1341 = vmatprep.subr.mxu0 %v1074
    %1342 = vmatpush1.msra.mxu0 %v1073
    %1343 = vmatprep.subr.mxu0 %v1082
    %1344 = vmatpush1.msra.mxu0 %v1081
    %1345 = vmatprep.subr.mxu0 %v1090
    %1346 = vmatpush1.msra.mxu0 %v1089
    %1347 = vmatprep.subr.mxu0 %v1098
    %1348 = vmatpush1.msra.mxu0 %v1097
    %1349 = vmatprep.subr.mxu0 %v1106
    %1350 = vmatpush1.msra.mxu0 %v1105
    %1351 = vmatprep.subr.mxu0 %v1114
    %1352 = vmatpush1.msra.mxu0 %v1113
    %1353 = vmatprep.subr.mxu0 %v1122
    %1354 = vmatpush1.msra.mxu0 %v1121
    %1355 = vmatprep.subr.mxu0 %v1130
    %1356 = vmatpush1.msra.mxu0 %v1129
    %1357 = vmatprep.subr.mxu0 %v1138
    %1358 = vmatpush1.msra.mxu0 %v1137
    %1359 = vmatprep.subr.mxu0 %v1146
    %1360 = vmatpush1.msra.mxu0 %v1145
    %1361 = vmatprep.subr.mxu0 %v1154
    %1362 = vmatpush1.msra.mxu0 %v1153
    %1363 = vmatprep.subr.mxu0 %v1162
    %1364 = vmatpush1.msra.mxu0 %v1161
    %1365 = vmatprep.subr.mxu0 %v1170
    %1366 = vmatpush1.msra.mxu0 %v1169
    %1367 = vmatprep.subr.mxu0 %v1178
    %1368 = vmatpush1.msra.mxu0 %v1177
    %1369 = vmatprep.subr.mxu0 %v1186
    %1370 = vmatpush1.msra.mxu0 %v1185
    %1371 = vmatprep.subr.mxu0 %v1194
    %1372 = vmatpush1.msra.mxu0 %v1193
    %1373 = vmatprep.subr.mxu0 %v1202
    %1374 = vmatpush1.msra.mxu0 %v1201
    %1375 = vmatprep.subr.mxu0 %v1210
    %1376 = vmatpush1.msra.mxu0 %v1209
    %1377 = vmatprep.subr.mxu0 %v1218
    %1378 = vmatpush1.msra.mxu0 %v1217
    %1379 = vmatprep.subr.mxu0 %v1226
    %1380 = vmatpush1.msra.mxu0 %v1225
    %1381 = vmatprep.subr.mxu0 %v1234
    %1382 = vmatpush1.msra.mxu0 %v1233
    %1383 = vmatprep.subr.mxu0 %v1242
    %1384 = vmatpush1.msra.mxu0 %v1241
    %1385 = vmatprep.subr.mxu0 %v1250
    %1386 = vmatpush1.msra.mxu0 %v1249
    %1387 = vmatprep.subr.mxu0 %v1258
    %1388 = vmatpush1.msra.mxu0 %v1257
    %1389 = vmatprep.subr.mxu0 %v1266
    %1390 = vmatpush1.msra.mxu0 %v1265
    %1391 = vmatprep.subr.mxu0 %v1274
    %1392 = vmatpush1.msra.mxu0 %v1273
    %1393 = vmatprep.subr.mxu0 %v1282
    %1394 = vmatpush1.msra.mxu0 %v1281
    %1395 = vmatprep.mubr.f32.mxu0 %v1032
    %1396 = vmatmul.mubr.f32.gmra.mrb[0].mxu0 %v1031
    %v1397 = vpop.f32.mrb[0].mxu0
    %v1398 = vadd.f32 %v1294, %v1397
    %v1399 = vpop.f32.mrb[0].mxu0
    %v1400 = vadd.f32 %v1298, %v1399
    %1401 = vdwg.mxu0
    %1402 = vmatprep.subr.mxu0 %v1036
    %1403 = vmatpush1.msra.mxu0 %v1035
    %1404 = vmatprep.subr.mxu0 %v1044
    %1405 = vmatpush1.msra.mxu0 %v1043
    %1406 = vmatprep.subr.mxu0 %v1052
    %1407 = vmatpush1.msra.mxu0 %v1051
    %1408 = vmatprep.subr.mxu0 %v1060
    %1409 = vmatpush1.msra.mxu0 %v1059
    %1410 = vmatprep.subr.mxu0 %v1068
    %1411 = vmatpush1.msra.mxu0 %v1067
    %1412 = vmatprep.subr.mxu0 %v1076
    %1413 = vmatpush1.msra.mxu0 %v1075
    %1414 = vmatprep.subr.mxu0 %v1084
    %1415 = vmatpush1.msra.mxu0 %v1083
    %1416 = vmatprep.subr.mxu0 %v1092
    %1417 = vmatpush1.msra.mxu0 %v1091
    %1418 = vmatprep.subr.mxu0 %v1100
    %1419 = vmatpush1.msra.mxu0 %v1099
    %1420 = vmatprep.subr.mxu0 %v1108
    %1421 = vmatpush1.msra.mxu0 %v1107
    %1422 = vmatprep.subr.mxu0 %v1116
    %1423 = vmatpush1.msra.mxu0 %v1115
    %1424 = vmatprep.subr.mxu0 %v1124
    %1425 = vmatpush1.msra.mxu0 %v1123
    %1426 = vmatprep.subr.mxu0 %v1132
    %1427 = vmatpush1.msra.mxu0 %v1131
    %1428 = vmatprep.subr.mxu0 %v1140
    %1429 = vmatpush1.msra.mxu0 %v1139
    %1430 = vmatprep.subr.mxu0 %v1148
    %1431 = vmatpush1.msra.mxu0 %v1147
    %1432 = vmatprep.subr.mxu0 %v1156
    %1433 = vmatpush1.msra.mxu0 %v1155
    %1434 = vmatprep.subr.mxu0 %v1164
    %1435 = vmatpush1.msra.mxu0 %v1163
    %1436 = vmatprep.subr.mxu0 %v1172
    %1437 = vmatpush1.msra.mxu0 %v1171
    %1438 = vmatprep.subr.mxu0 %v1180
    %1439 = vmatpush1.msra.mxu0 %v1179
    %1440 = vmatprep.subr.mxu0 %v1188
    %1441 = vmatpush1.msra.mxu0 %v1187
    %1442 = vmatprep.subr.mxu0 %v1196
    %1443 = vmatpush1.msra.mxu0 %v1195
    %1444 = vmatprep.subr.mxu0 %v1204
    %1445 = vmatpush1.msra.mxu0 %v1203
    %1446 = vmatprep.subr.mxu0 %v1212
    %1447 = vmatpush1.msra.mxu0 %v1211
    %1448 = vmatprep.subr.mxu0 %v1220
    %1449 = vmatpush1.msra.mxu0 %v1219
    %1450 = vmatprep.subr.mxu0 %v1228
    %1451 = vmatpush1.msra.mxu0 %v1227
    %1452 = vmatprep.subr.mxu0 %v1236
    %1453 = vmatpush1.msra.mxu0 %v1235
    %1454 = vmatprep.subr.mxu0 %v1244
    %1455 = vmatpush1.msra.mxu0 %v1243
    %1456 = vmatprep.subr.mxu0 %v1252
    %1457 = vmatpush1.msra.mxu0 %v1251
    %1458 = vmatprep.subr.mxu0 %v1260
    %1459 = vmatpush1.msra.mxu0 %v1259
    %1460 = vmatprep.subr.mxu0 %v1268
    %1461 = vmatpush1.msra.mxu0 %v1267
    %1462 = vmatprep.subr.mxu0 %v1276
    %1463 = vmatpush1.msra.mxu0 %v1275
    %1464 = vmatprep.subr.mxu0 %v1284
    %1465 = vmatpush1.msra.mxu0 %v1283
    %1466 = vmatprep.mubr.f32.mxu0 %v1032
    %1467 = vmatmul.mubr.f32.gmra.mrb[0].mxu0 %v1031
    %v1468 = vpop.f32.mrb[0].mxu0
    %v1469 = vadd.f32 %v1302, %v1468
    %v1470 = vpop.f32.mrb[0].mxu0
    %v1471 = vadd.f32 %v1306, %v1470
    %1472 = vdwg.mxu0
    %1473 = vmatprep.subr.mxu0 %v1038
    %1474 = vmatpush1.msra.mxu0 %v1037
    %1475 = vmatprep.subr.mxu0 %v1046
    %1476 = vmatpush1.msra.mxu0 %v1045
    %1477 = vmatprep.subr.mxu0 %v1054
    %1478 = vmatpush1.msra.mxu0 %v1053
    %1479 = vmatprep.subr.mxu0 %v1062
    %1480 = vmatpush1.msra.mxu0 %v1061
    %1481 = vmatprep.subr.mxu0 %v1070
    %1482 = vmatpush1.msra.mxu0 %v1069
    %1483 = vmatprep.subr.mxu0 %v1078
    %1484 = vmatpush1.msra.mxu0 %v1077
    %1485 = vmatprep.subr.mxu0 %v1086
    %1486 = vmatpush1.msra.mxu0 %v1085
    %1487 = vmatprep.subr.mxu0 %v1094
    %1488 = vmatpush1.msra.mxu0 %v1093
    %1489 = vmatprep.subr.mxu0 %v1102
    %1490 = vmatpush1.msra.mxu0 %v1101
    %1491 = vmatprep.subr.mxu0 %v1110
    %1492 = vmatpush1.msra.mxu0 %v1109
    %1493 = vmatprep.subr.mxu0 %v1118
    %1494 = vmatpush1.msra.mxu0 %v1117
    %1495 = vmatprep.subr.mxu0 %v1126
    %1496 = vmatpush1.msra.mxu0 %v1125
    %1497 = vmatprep.subr.mxu0 %v1134
    %1498 = vmatpush1.msra.mxu0 %v1133
    %1499 = vmatprep.subr.mxu0 %v1142
    %1500 = vmatpush1.msra.mxu0 %v1141
    %1501 = vmatprep.subr.mxu0 %v1150
    %1502 = vmatpush1.msra.mxu0 %v1149
    %1503 = vmatprep.subr.mxu0 %v1158
    %1504 = vmatpush1.msra.mxu0 %v1157
    %1505 = vmatprep.subr.mxu0 %v1166
    %1506 = vmatpush1.msra.mxu0 %v1165
    %1507 = vmatprep.subr.mxu0 %v1174
    %1508 = vmatpush1.msra.mxu0 %v1173
    %1509 = vmatprep.subr.mxu0 %v1182
    %1510 = vmatpush1.msra.mxu0 %v1181
    %1511 = vmatprep.subr.mxu0 %v1190
    %1512 = vmatpush1.msra.mxu0 %v1189
    %1513 = vmatprep.subr.mxu0 %v1198
    %1514 = vmatpush1.msra.mxu0 %v1197
    %1515 = vmatprep.subr.mxu0 %v1206
    %1516 = vmatpush1.msra.mxu0 %v1205
    %1517 = vmatprep.subr.mxu0 %v1214
    %1518 = vmatpush1.msra.mxu0 %v1213
    %1519 = vmatprep.subr.mxu0 %v1222
    %1520 = vmatpush1.msra.mxu0 %v1221
    %1521 = vmatprep.subr.mxu0 %v1230
    %1522 = vmatpush1.msra.mxu0 %v1229
    %1523 = vmatprep.subr.mxu0 %v1238
    %1524 = vmatpush1.msra.mxu0 %v1237
    %1525 = vmatprep.subr.mxu0 %v1246
    %1526 = vmatpush1.msra.mxu0 %v1245
    %1527 = vmatprep.subr.mxu0 %v1254
    %1528 = vmatpush1.msra.mxu0 %v1253
    %1529 = vmatprep.subr.mxu0 %v1262
    %1530 = vmatpush1.msra.mxu0 %v1261
    %1531 = vmatprep.subr.mxu0 %v1270
    %1532 = vmatpush1.msra.mxu0 %v1269
    %1533 = vmatprep.subr.mxu0 %v1278
    %1534 = vmatpush1.msra.mxu0 %v1277
    %1535 = vmatprep.subr.mxu0 %v1286
    %1536 = vmatpush1.msra.mxu0 %v1285
    %1537 = vmatprep.mubr.f32.mxu0 %v1032
    %1538 = vmatmul.mubr.f32.gmra.mrb[0].mxu0 %v1031
    %v1539 = vpop.f32.mrb[0].mxu0
    %v1540 = vadd.f32 %v1310, %v1539
    %v1541 = vpop.f32.mrb[0].mxu0
    %v1542 = vadd.f32 %v1314, %v1541
    %1543 = vdwg.mxu0
    %1544 = vmatprep.subr.mxu0 %v1040
    %1545 = vmatpush1.msra.mxu0 %v1039
    %1546 = vmatprep.subr.mxu0 %v1048
    %1547 = vmatpush1.msra.mxu0 %v1047
    %1548 = vmatprep.subr.mxu0 %v1056
    %1549 = vmatpush1.msra.mxu0 %v1055
    %1550 = vmatprep.subr.mxu0 %v1064
    %1551 = vmatpush1.msra.mxu0 %v1063
    %1552 = vmatprep.subr.mxu0 %v1072
    %1553 = vmatpush1.msra.mxu0 %v1071
    %1554 = vmatprep.subr.mxu0 %v1080
    %1555 = vmatpush1.msra.mxu0 %v1079
    %1556 = vmatprep.subr.mxu0 %v1088
    %1557 = vmatpush1.msra.mxu0 %v1087
    %1558 = vmatprep.subr.mxu0 %v1096
    %1559 = vmatpush1.msra.mxu0 %v1095
    %1560 = vmatprep.subr.mxu0 %v1104
    %1561 = vmatpush1.msra.mxu0 %v1103
    %1562 = vmatprep.subr.mxu0 %v1112
    %1563 = vmatpush1.msra.mxu0 %v1111
    %1564 = vmatprep.subr.mxu0 %v1120
    %1565 = vmatpush1.msra.mxu0 %v1119
    %1566 = vmatprep.subr.mxu0 %v1128
    %1567 = vmatpush1.msra.mxu0 %v1127
    %1568 = vmatprep.subr.mxu0 %v1136
    %1569 = vmatpush1.msra.mxu0 %v1135
    %1570 = vmatprep.subr.mxu0 %v1144
    %1571 = vmatpush1.msra.mxu0 %v1143
    %1572 = vmatprep.subr.mxu0 %v1152
    %1573 = vmatpush1.msra.mxu0 %v1151
    %1574 = vmatprep.subr.mxu0 %v1160
    %1575 = vmatpush1.msra.mxu0 %v1159
    %1576 = vmatprep.subr.mxu0 %v1168
    %1577 = vmatpush1.msra.mxu0 %v1167
    %1578 = vmatprep.subr.mxu0 %v1176
    %1579 = vmatpush1.msra.mxu0 %v1175
    %1580 = vmatprep.subr.mxu0 %v1184
    %1581 = vmatpush1.msra.mxu0 %v1183
    %1582 = vmatprep.subr.mxu0 %v1192
    %1583 = vmatpush1.msra.mxu0 %v1191
    %1584 = vmatprep.subr.mxu0 %v1200
    %1585 = vmatpush1.msra.mxu0 %v1199
    %1586 = vmatprep.subr.mxu0 %v1208
    %1587 = vmatpush1.msra.mxu0 %v1207
    %1588 = vmatprep.subr.mxu0 %v1216
    %1589 = vmatpush1.msra.mxu0 %v1215
    %1590 = vmatprep.subr.mxu0 %v1224
    %1591 = vmatpush1.msra.mxu0 %v1223
    %1592 = vmatprep.subr.mxu0 %v1232
    %1593 = vmatpush1.msra.mxu0 %v1231
    %1594 = vmatprep.subr.mxu0 %v1240
    %1595 = vmatpush1.msra.mxu0 %v1239
    %1596 = vmatprep.subr.mxu0 %v1248
    %1597 = vmatpush1.msra.mxu0 %v1247
    %1598 = vmatprep.subr.mxu0 %v1256
    %1599 = vmatpush1.msra.mxu0 %v1255
    %1600 = vmatprep.subr.mxu0 %v1264
    %1601 = vmatpush1.msra.mxu0 %v1263
    %1602 = vmatprep.subr.mxu0 %v1272
    %1603 = vmatpush1.msra.mxu0 %v1271
    %1604 = vmatprep.subr.mxu0 %v1280
    %1605 = vmatpush1.msra.mxu0 %v1279
    %1606 = vmatprep.subr.mxu0 %v1288
    %1607 = vmatpush1.msra.mxu0 %v1287
    %1608 = vmatprep.mubr.f32.mxu0 %v1032
    %1609 = vmatmul.mubr.f32.gmra.mrb[0].mxu0 %v1031
    %v1610 = vpop.f32.mrb[0].mxu0
    %v1611 = vadd.f32 %v1318, %v1610
    %v1612 = vpop.f32.mrb[0].mxu0
    %v1613 = vadd.f32 %v1322, %v1612
    %1614 = vdwg.mxu0
    %vm1615 = vcmp.ge.f32.partialorder %v1398, 0.0
    %vm1616 = vcmp.ge.f32.partialorder %v1400, 0.0
    %vm1617 = vcmp.ge.f32.partialorder %v1469, 0.0
    %vm1618 = vcmp.ge.f32.partialorder %v1471, 0.0
    %vm1619 = vcmp.ge.f32.partialorder %v1540, 0.0
    %vm1620 = vcmp.ge.f32.partialorder %v1542, 0.0
    %vm1621 = vcmp.ge.f32.partialorder %v1611, 0.0
    %vm1622 = vcmp.ge.f32.partialorder %v1613, 0.0
    %v1623 = vmul.f32 %v1398, 0.2
    %v1624 = vmul.f32 %v1400, 0.2
    %v1625 = vmul.f32 %v1469, 0.2
    %v1626 = vmul.f32 %v1471, 0.2
    %v1627 = vmul.f32 %v1540, 0.2
    %v1628 = vmul.f32 %v1542, 0.2
    %v1629 = vmul.f32 %v1611, 0.2
    %v1630 = vmul.f32 %v1613, 0.2
    %v1631 = vsel %vm1615, %v1398, %v1623
    %v1632 = vsel %vm1616, %v1400, %v1624
    %v1633 = vsel %vm1617, %v1469, %v1625
    %v1634 = vsel %vm1618, %v1471, %v1626
    %v1635 = vsel %vm1619, %v1540, %v1627
    %v1636 = vsel %vm1620, %v1542, %v1628
    %v1637 = vsel %vm1621, %v1611, %v1629
    %v1638 = vsel %vm1622, %v1613, %v1630
    %v1639 = vld [vmem:[%s7] sm:$0xff]
    %v1640 = vld [vmem:[%s7 + $0x8] sm:$0xff]
    %v1641 = vld [vmem:[%s7 + $0x10] sm:$0xff]
    %v1642 = vld [vmem:[%s7 + $0x18] sm:$0xff]
    %v1643 = vld [vmem:[%s7 + $0x20] sm:$0xff]
    %v1644 = vld [vmem:[%s7 + $0x28] sm:$0xff]
    %v1645 = vld [vmem:[%s7 + $0x30] sm:$0xff]
    %v1646 = vld [vmem:[%s7 + $0x38] sm:$0xff]
    %v1647 = vld [vmem:[%s7 + $0x40] sm:$0xff]
    %v1648 = vld [vmem:[%s7 + $0x48] sm:$0xff]
    %v1649 = vld [vmem:[%s7 + $0x50] sm:$0xff]
    %v1650 = vld [vmem:[%s7 + $0x58] sm:$0xff]
    %v1651 = vld [vmem:[%s7 + $0x60] sm:$0xff]
    %v1652 = vld [vmem:[%s7 + $0x68] sm:$0xff]
    %v1653 = vld [vmem:[%s7 + $0x70] sm:$0xff]
    %v1654 = vld [vmem:[%s7 + $0x78] sm:$0xff]
    %v1655 = vld [vmem:[%s7 + $0x80] sm:$0xff]
    %v1656 = vld [vmem:[%s7 + $0x88] sm:$0xff]
    %v1657 = vld [vmem:[%s7 + $0x90] sm:$0xff]
    %v1658 = vld [vmem:[%s7 + $0x98] sm:$0xff]
    %v1659 = vld [vmem:[%s7 + $0xa0] sm:$0xff]
    %v1660 = vld [vmem:[%s7 + $0xa8] sm:$0xff]
    %v1661 = vld [vmem:[%s7 + $0xb0] sm:$0xff]
    %v1662 = vld [vmem:[%s7 + $0xb8] sm:$0xff]
    %v1663 = vld [vmem:[%s7 + $0xc0] sm:$0xff]
    %v1664 = vld [vmem:[%s7 + $0xc8] sm:$0xff]
    %v1665 = vld [vmem:[%s7 + $0xd0] sm:$0xff]
    %v1666 = vld [vmem:[%s7 + $0xd8] sm:$0xff]
    %v1667 = vld [vmem:[%s7 + $0xe0] sm:$0xff]
    %v1668 = vld [vmem:[%s7 + $0xe8] sm:$0xff]
    %v1669 = vld [vmem:[%s7 + $0xf0] sm:$0xff]
    %v1670 = vld [vmem:[%s7 + $0xf8] sm:$0xff]
    %v1671 = vld [vmem:[%s7 + $0x100] sm:$0xff]
    %v1672 = vld [vmem:[%s7 + $0x108] sm:$0xff]
    %v1673 = vld [vmem:[%s7 + $0x110] sm:$0xff]
    %v1674 = vld [vmem:[%s7 + $0x118] sm:$0xff]
    %v1675 = vld [vmem:[%s7 + $0x120] sm:$0xff]
    %v1676 = vld [vmem:[%s7 + $0x128] sm:$0xff]
    %v1677 = vld [vmem:[%s7 + $0x130] sm:$0xff]
    %v1678 = vld [vmem:[%s7 + $0x138] sm:$0xff]
    %v1679 = vld [vmem:[%s7 + $0x140] sm:$0xff]
    %v1680 = vld [vmem:[%s7 + $0x148] sm:$0xff]
    %v1681 = vld [vmem:[%s7 + $0x150] sm:$0xff]
    %v1682 = vld [vmem:[%s7 + $0x158] sm:$0xff]
    %v1683 = vld [vmem:[%s7 + $0x160] sm:$0xff]
    %v1684 = vld [vmem:[%s7 + $0x168] sm:$0xff]
    %v1685 = vld [vmem:[%s7 + $0x170] sm:$0xff]
    %v1686 = vld [vmem:[%s7 + $0x178] sm:$0xff]
    %v1687 = vld [vmem:[%s7 + $0x180] sm:$0xff]
    %v1688 = vld [vmem:[%s7 + $0x188] sm:$0xff]
    %v1689 = vld [vmem:[%s7 + $0x190] sm:$0xff]
    %v1690 = vld [vmem:[%s7 + $0x198] sm:$0xff]
    %v1691 = vld [vmem:[%s7 + $0x1a0] sm:$0xff]
    %v1692 = vld [vmem:[%s7 + $0x1a8] sm:$0xff]
    %v1693 = vld [vmem:[%s7 + $0x1b0] sm:$0xff]
    %v1694 = vld [vmem:[%s7 + $0x1b8] sm:$0xff]
    %v1695 = vld [vmem:[%s7 + $0x1c0] sm:$0xff]
    %v1696 = vld [vmem:[%s7 + $0x1c8] sm:$0xff]
    %v1697 = vld [vmem:[%s7 + $0x1d0] sm:$0xff]
    %v1698 = vld [vmem:[%s7 + $0x1d8] sm:$0xff]
    %v1699 = vld [vmem:[%s7 + $0x1e0] sm:$0xff]
    %v1700 = vld [vmem:[%s7 + $0x1e8] sm:$0xff]
    %v1701 = vld [vmem:[%s7 + $0x1f0] sm:$0xff]
    %v1702 = vld [vmem:[%s7 + $0x1f8] sm:$0xff]
    %v1703 = vld [vmem:[%s7 + $0x200] sm:$0xff]
    %v1704 = vld [vmem:[%s7 + $0x208] sm:$0xff]
    %v1705 = vld [vmem:[%s7 + $0x210] sm:$0xff]
    %v1706 = vld [vmem:[%s7 + $0x218] sm:$0xff]
    %v1707 = vld [vmem:[%s7 + $0x220] sm:$0xff]
    %v1708 = vld [vmem:[%s7 + $0x228] sm:$0xff]
    %v1709 = vld [vmem:[%s7 + $0x230] sm:$0xff]
    %v1710 = vld [vmem:[%s7 + $0x238] sm:$0xff]
    %v1711 = vld [vmem:[%s7 + $0x240] sm:$0xff]
    %v1712 = vld [vmem:[%s7 + $0x248] sm:$0xff]
    %v1713 = vld [vmem:[%s7 + $0x250] sm:$0xff]
    %v1714 = vld [vmem:[%s7 + $0x258] sm:$0xff]
    %v1715 = vld [vmem:[%s7 + $0x260] sm:$0xff]
    %v1716 = vld [vmem:[%s7 + $0x268] sm:$0xff]
    %v1717 = vld [vmem:[%s7 + $0x270] sm:$0xff]
    %v1718 = vld [vmem:[%s7 + $0x278] sm:$0xff]
    %v1719 = vld [vmem:[%s7 + $0x280] sm:$0xff]
    %v1720 = vld [vmem:[%s7 + $0x288] sm:$0xff]
    %v1721 = vld [vmem:[%s7 + $0x290] sm:$0xff]
    %v1722 = vld [vmem:[%s7 + $0x298] sm:$0xff]
    %v1723 = vld [vmem:[%s7 + $0x2a0] sm:$0xff]
    %v1724 = vld [vmem:[%s7 + $0x2a8] sm:$0xff]
    %v1725 = vld [vmem:[%s7 + $0x2b0] sm:$0xff]
    %v1726 = vld [vmem:[%s7 + $0x2b8] sm:$0xff]
    %v1727 = vld [vmem:[%s7 + $0x2c0] sm:$0xff]
    %v1728 = vld [vmem:[%s7 + $0x2c8] sm:$0xff]
    %v1729 = vld [vmem:[%s7 + $0x2d0] sm:$0xff]
    %v1730 = vld [vmem:[%s7 + $0x2d8] sm:$0xff]
    %v1731 = vld [vmem:[%s7 + $0x2e0] sm:$0xff]
    %v1732 = vld [vmem:[%s7 + $0x2e8] sm:$0xff]
    %v1733 = vld [vmem:[%s7 + $0x2f0] sm:$0xff]
    %v1734 = vld [vmem:[%s7 + $0x2f8] sm:$0xff]
    %v1735 = vld [vmem:[%s7 + $0x300] sm:$0xff]
    %v1736 = vld [vmem:[%s7 + $0x308] sm:$0xff]
    %v1737 = vld [vmem:[%s7 + $0x310] sm:$0xff]
    %v1738 = vld [vmem:[%s7 + $0x318] sm:$0xff]
    %v1739 = vld [vmem:[%s7 + $0x320] sm:$0xff]
    %v1740 = vld [vmem:[%s7 + $0x328] sm:$0xff]
    %v1741 = vld [vmem:[%s7 + $0x330] sm:$0xff]
    %v1742 = vld [vmem:[%s7 + $0x338] sm:$0xff]
    %v1743 = vld [vmem:[%s7 + $0x340] sm:$0xff]
    %v1744 = vld [vmem:[%s7 + $0x348] sm:$0xff]
    %v1745 = vld [vmem:[%s7 + $0x350] sm:$0xff]
    %v1746 = vld [vmem:[%s7 + $0x358] sm:$0xff]
    %v1747 = vld [vmem:[%s7 + $0x360] sm:$0xff]
    %v1748 = vld [vmem:[%s7 + $0x368] sm:$0xff]
    %v1749 = vld [vmem:[%s7 + $0x370] sm:$0xff]
    %v1750 = vld [vmem:[%s7 + $0x378] sm:$0xff]
    %v1751 = vld [vmem:[%s7 + $0x380] sm:$0xff]
    %v1752 = vld [vmem:[%s7 + $0x388] sm:$0xff]
    %v1753 = vld [vmem:[%s7 + $0x390] sm:$0xff]
    %v1754 = vld [vmem:[%s7 + $0x398] sm:$0xff]
    %v1755 = vld [vmem:[%s7 + $0x3a0] sm:$0xff]
    %v1756 = vld [vmem:[%s7 + $0x3a8] sm:$0xff]
    %v1757 = vld [vmem:[%s7 + $0x3b0] sm:$0xff]
    %v1758 = vld [vmem:[%s7 + $0x3b8] sm:$0xff]
    %v1759 = vld [vmem:[%s7 + $0x3c0] sm:$0xff]
    %v1760 = vld [vmem:[%s7 + $0x3c8] sm:$0xff]
    %v1761 = vld [vmem:[%s7 + $0x3d0] sm:$0xff]
    %v1762 = vld [vmem:[%s7 + $0x3d8] sm:$0xff]
    %v1763 = vld [vmem:[%s7 + $0x3e0] sm:$0xff]
    %v1764 = vld [vmem:[%s7 + $0x3e8] sm:$0xff]
    %v1765 = vld [vmem:[%s7 + $0x3f0] sm:$0xff]
    %v1766 = vld [vmem:[%s7 + $0x3f8] sm:$0xff]
    %v1767 = vld [vmem:[%s8] sm:$0x1]
    %v1769 = vlaneseq
    %v1770 = vshrl.u32 %v1769, 7
    %v1771 = vsub.s32 0, %v1770
    %v1772 = vrot.slane %v1767, %v1771
    %1774 = vmatprep.subr.mxu0 0.0
    %1775 = vmatpush1.msra.mxu0 %v1639
    %1776 = vmatprep.subr.mxu0 0.0
    %1777 = vmatpush1.msra.mxu0 %v1640
    %1778 = vmatprep.subr.mxu0 0.0
    %1779 = vmatpush1.msra.mxu0 %v1641
    %1780 = vmatprep.subr.mxu0 0.0
    %1781 = vmatpush1.msra.mxu0 %v1642
    %1782 = vmatprep.subr.mxu0 0.0
    %1783 = vmatpush1.msra.mxu0 %v1643
    %1784 = vmatprep.subr.mxu0 0.0
    %1785 = vmatpush1.msra.mxu0 %v1644
    %1786 = vmatprep.subr.mxu0 0.0
    %1787 = vmatpush1.msra.mxu0 %v1645
    %1788 = vmatprep.subr.mxu0 0.0
    %1789 = vmatpush1.msra.mxu0 %v1646
    %1790 = vmatprep.subr.mxu0 0.0
    %1791 = vmatpush1.msra.mxu0 %v1647
    %1792 = vmatprep.subr.mxu0 0.0
    %1793 = vmatpush1.msra.mxu0 %v1648
    %1794 = vmatprep.subr.mxu0 0.0
    %1795 = vmatpush1.msra.mxu0 %v1649
    %1796 = vmatprep.subr.mxu0 0.0
    %1797 = vmatpush1.msra.mxu0 %v1650
    %1798 = vmatprep.subr.mxu0 0.0
    %1799 = vmatpush1.msra.mxu0 %v1651
    %1800 = vmatprep.subr.mxu0 0.0
    %1801 = vmatpush1.msra.mxu0 %v1652
    %1802 = vmatprep.subr.mxu0 0.0
    %1803 = vmatpush1.msra.mxu0 %v1653
    %1804 = vmatprep.subr.mxu0 0.0
    %1805 = vmatpush1.msra.mxu0 %v1654
    %1806 = vmatprep.subr.mxu0 0.0
    %1807 = vmatpush1.msra.mxu0 %v1655
    %1808 = vmatprep.subr.mxu0 0.0
    %1809 = vmatpush1.msra.mxu0 %v1656
    %1810 = vmatprep.subr.mxu0 0.0
    %1811 = vmatpush1.msra.mxu0 %v1657
    %1812 = vmatprep.subr.mxu0 0.0
    %1813 = vmatpush1.msra.mxu0 %v1658
    %1814 = vmatprep.subr.mxu0 0.0
    %1815 = vmatpush1.msra.mxu0 %v1659
    %1816 = vmatprep.subr.mxu0 0.0
    %1817 = vmatpush1.msra.mxu0 %v1660
    %1818 = vmatprep.subr.mxu0 0.0
    %1819 = vmatpush1.msra.mxu0 %v1661
    %1820 = vmatprep.subr.mxu0 0.0
    %1821 = vmatpush1.msra.mxu0 %v1662
    %1822 = vmatprep.subr.mxu0 0.0
    %1823 = vmatpush1.msra.mxu0 %v1663
    %1824 = vmatprep.subr.mxu0 0.0
    %1825 = vmatpush1.msra.mxu0 %v1664
    %1826 = vmatprep.subr.mxu0 0.0
    %1827 = vmatpush1.msra.mxu0 %v1665
    %1828 = vmatprep.subr.mxu0 0.0
    %1829 = vmatpush1.msra.mxu0 %v1666
    %1830 = vmatprep.subr.mxu0 0.0
    %1831 = vmatpush1.msra.mxu0 %v1667
    %1832 = vmatprep.subr.mxu0 0.0
    %1833 = vmatpush1.msra.mxu0 %v1668
    %1834 = vmatprep.subr.mxu0 0.0
    %1835 = vmatpush1.msra.mxu0 %v1669
    %1836 = vmatprep.subr.mxu0 0.0
    %1837 = vmatpush1.msra.mxu0 %v1670
    %1838 = vmatprep.mubr.f32.mxu0 %v1632
    %1839 = vmatmul.mubr.f32.gmra.mrb[0].mxu0 %v1631
    %v1840 = vpop.f32.mrb[0].mxu0
    %v1841 = vadd.f32 %v1772, %v1840
    %v1842 = vpop.f32.mrb[0].mxu0
    %1843 = vdwg.mxu0
    %1844 = vmatprep.subr.mxu0 0.0
    %1845 = vmatpush1.msra.mxu0 %v1671
    %1846 = vmatprep.subr.mxu0 0.0
    %1847 = vmatpush1.msra.mxu0 %v1672
    %1848 = vmatprep.subr.mxu0 0.0
    %1849 = vmatpush1.msra.mxu0 %v1673
    %1850 = vmatprep.subr.mxu0 0.0
    %1851 = vmatpush1.msra.mxu0 %v1674
    %1852 = vmatprep.subr.mxu0 0.0
    %1853 = vmatpush1.msra.mxu0 %v1675
    %1854 = vmatprep.subr.mxu0 0.0
    %1855 = vmatpush1.msra.mxu0 %v1676
    %1856 = vmatprep.subr.mxu0 0.0
    %1857 = vmatpush1.msra.mxu0 %v1677
    %1858 = vmatprep.subr.mxu0 0.0
    %1859 = vmatpush1.msra.mxu0 %v1678
    %1860 = vmatprep.subr.mxu0 0.0
    %1861 = vmatpush1.msra.mxu0 %v1679
    %1862 = vmatprep.subr.mxu0 0.0
    %1863 = vmatpush1.msra.mxu0 %v1680
    %1864 = vmatprep.subr.mxu0 0.0
    %1865 = vmatpush1.msra.mxu0 %v1681
    %1866 = vmatprep.subr.mxu0 0.0
    %1867 = vmatpush1.msra.mxu0 %v1682
    %1868 = vmatprep.subr.mxu0 0.0
    %1869 = vmatpush1.msra.mxu0 %v1683
    %1870 = vmatprep.subr.mxu0 0.0
    %1871 = vmatpush1.msra.mxu0 %v1684
    %1872 = vmatprep.subr.mxu0 0.0
    %1873 = vmatpush1.msra.mxu0 %v1685
    %1874 = vmatprep.subr.mxu0 0.0
    %1875 = vmatpush1.msra.mxu0 %v1686
    %1876 = vmatprep.subr.mxu0 0.0
    %1877 = vmatpush1.msra.mxu0 %v1687
    %1878 = vmatprep.subr.mxu0 0.0
    %1879 = vmatpush1.msra.mxu0 %v1688
    %1880 = vmatprep.subr.mxu0 0.0
    %1881 = vmatpush1.msra.mxu0 %v1689
    %1882 = vmatprep.subr.mxu0 0.0
    %1883 = vmatpush1.msra.mxu0 %v1690
    %1884 = vmatprep.subr.mxu0 0.0
    %1885 = vmatpush1.msra.mxu0 %v1691
    %1886 = vmatprep.subr.mxu0 0.0
    %1887 = vmatpush1.msra.mxu0 %v1692
    %1888 = vmatprep.subr.mxu0 0.0
    %1889 = vmatpush1.msra.mxu0 %v1693
    %1890 = vmatprep.subr.mxu0 0.0
    %1891 = vmatpush1.msra.mxu0 %v1694
    %1892 = vmatprep.subr.mxu0 0.0
    %1893 = vmatpush1.msra.mxu0 %v1695
    %1894 = vmatprep.subr.mxu0 0.0
    %1895 = vmatpush1.msra.mxu0 %v1696
    %1896 = vmatprep.subr.mxu0 0.0
    %1897 = vmatpush1.msra.mxu0 %v1697
    %1898 = vmatprep.subr.mxu0 0.0
    %1899 = vmatpush1.msra.mxu0 %v1698
    %1900 = vmatprep.subr.mxu0 0.0
    %1901 = vmatpush1.msra.mxu0 %v1699
    %1902 = vmatprep.subr.mxu0 0.0
    %1903 = vmatpush1.msra.mxu0 %v1700
    %1904 = vmatprep.subr.mxu0 0.0
    %1905 = vmatpush1.msra.mxu0 %v1701
    %1906 = vmatprep.subr.mxu0 0.0
    %1907 = vmatpush1.msra.mxu0 %v1702
    %1908 = vmatprep.mubr.f32.mxu0 %v1634
    %1909 = vmatmul.mubr.f32.gmra.mrb[0].mxu0 %v1633
    %v1910 = vpop.f32.mrb[0].mxu0
    %v1911 = vadd.f32 %v1841, %v1910
    %v1912 = vpop.f32.mrb[0].mxu0
    %1913 = vdwg.mxu0
    %1914 = vmatprep.subr.mxu0 0.0
    %1915 = vmatpush1.msra.mxu0 %v1703
    %1916 = vmatprep.subr.mxu0 0.0
    %1917 = vmatpush1.msra.mxu0 %v1704
    %1918 = vmatprep.subr.mxu0 0.0
    %1919 = vmatpush1.msra.mxu0 %v1705
    %1920 = vmatprep.subr.mxu0 0.0
    %1921 = vmatpush1.msra.mxu0 %v1706
    %1922 = vmatprep.subr.mxu0 0.0
    %1923 = vmatpush1.msra.mxu0 %v1707
    %1924 = vmatprep.subr.mxu0 0.0
    %1925 = vmatpush1.msra.mxu0 %v1708
    %1926 = vmatprep.subr.mxu0 0.0
    %1927 = vmatpush1.msra.mxu0 %v1709
    %1928 = vmatprep.subr.mxu0 0.0
    %1929 = vmatpush1.msra.mxu0 %v1710
    %1930 = vmatprep.subr.mxu0 0.0
    %1931 = vmatpush1.msra.mxu0 %v1711
    %1932 = vmatprep.subr.mxu0 0.0
    %1933 = vmatpush1.msra.mxu0 %v1712
    %1934 = vmatprep.subr.mxu0 0.0
    %1935 = vmatpush1.msra.mxu0 %v1713
    %1936 = vmatprep.subr.mxu0 0.0
    %1937 = vmatpush1.msra.mxu0 %v1714
    %1938 = vmatprep.subr.mxu0 0.0
    %1939 = vmatpush1.msra.mxu0 %v1715
    %1940 = vmatprep.subr.mxu0 0.0
    %1941 = vmatpush1.msra.mxu0 %v1716
    %1942 = vmatprep.subr.mxu0 0.0
    %1943 = vmatpush1.msra.mxu0 %v1717
    %1944 = vmatprep.subr.mxu0 0.0
    %1945 = vmatpush1.msra.mxu0 %v1718
    %1946 = vmatprep.subr.mxu0 0.0
    %1947 = vmatpush1.msra.mxu0 %v1719
    %1948 = vmatprep.subr.mxu0 0.0
    %1949 = vmatpush1.msra.mxu0 %v1720
    %1950 = vmatprep.subr.mxu0 0.0
    %1951 = vmatpush1.msra.mxu0 %v1721
    %1952 = vmatprep.subr.mxu0 0.0
    %1953 = vmatpush1.msra.mxu0 %v1722
    %1954 = vmatprep.subr.mxu0 0.0
    %1955 = vmatpush1.msra.mxu0 %v1723
    %1956 = vmatprep.subr.mxu0 0.0
    %1957 = vmatpush1.msra.mxu0 %v1724
    %1958 = vmatprep.subr.mxu0 0.0
    %1959 = vmatpush1.msra.mxu0 %v1725
    %1960 = vmatprep.subr.mxu0 0.0
    %1961 = vmatpush1.msra.mxu0 %v1726
    %1962 = vmatprep.subr.mxu0 0.0
    %1963 = vmatpush1.msra.mxu0 %v1727
    %1964 = vmatprep.subr.mxu0 0.0
    %1965 = vmatpush1.msra.mxu0 %v1728
    %1966 = vmatprep.subr.mxu0 0.0
    %1967 = vmatpush1.msra.mxu0 %v1729
    %1968 = vmatprep.subr.mxu0 0.0
    %1969 = vmatpush1.msra.mxu0 %v1730
    %1970 = vmatprep.subr.mxu0 0.0
    %1971 = vmatpush1.msra.mxu0 %v1731
    %1972 = vmatprep.subr.mxu0 0.0
    %1973 = vmatpush1.msra.mxu0 %v1732
    %1974 = vmatprep.subr.mxu0 0.0
    %1975 = vmatpush1.msra.mxu0 %v1733
    %1976 = vmatprep.subr.mxu0 0.0
    %1977 = vmatpush1.msra.mxu0 %v1734
    %1978 = vmatprep.mubr.f32.mxu0 %v1636
    %1979 = vmatmul.mubr.f32.gmra.mrb[0].mxu0 %v1635
    %v1980 = vpop.f32.mrb[0].mxu0
    %v1981 = vadd.f32 %v1911, %v1980
    %v1982 = vpop.f32.mrb[0].mxu0
    %1983 = vdwg.mxu0
    %1984 = vmatprep.subr.mxu0 0.0
    %1985 = vmatpush1.msra.mxu0 %v1735
    %1986 = vmatprep.subr.mxu0 0.0
    %1987 = vmatpush1.msra.mxu0 %v1736
    %1988 = vmatprep.subr.mxu0 0.0
    %1989 = vmatpush1.msra.mxu0 %v1737
    %1990 = vmatprep.subr.mxu0 0.0
    %1991 = vmatpush1.msra.mxu0 %v1738
    %1992 = vmatprep.subr.mxu0 0.0
    %1993 = vmatpush1.msra.mxu0 %v1739
    %1994 = vmatprep.subr.mxu0 0.0
    %1995 = vmatpush1.msra.mxu0 %v1740
    %1996 = vmatprep.subr.mxu0 0.0
    %1997 = vmatpush1.msra.mxu0 %v1741
    %1998 = vmatprep.subr.mxu0 0.0
    %1999 = vmatpush1.msra.mxu0 %v1742
    %2000 = vmatprep.subr.mxu0 0.0
    %2001 = vmatpush1.msra.mxu0 %v1743
    %2002 = vmatprep.subr.mxu0 0.0
    %2003 = vmatpush1.msra.mxu0 %v1744
    %2004 = vmatprep.subr.mxu0 0.0
    %2005 = vmatpush1.msra.mxu0 %v1745
    %2006 = vmatprep.subr.mxu0 0.0
    %2007 = vmatpush1.msra.mxu0 %v1746
    %2008 = vmatprep.subr.mxu0 0.0
    %2009 = vmatpush1.msra.mxu0 %v1747
    %2010 = vmatprep.subr.mxu0 0.0
    %2011 = vmatpush1.msra.mxu0 %v1748
    %2012 = vmatprep.subr.mxu0 0.0
    %2013 = vmatpush1.msra.mxu0 %v1749
    %2014 = vmatprep.subr.mxu0 0.0
    %2015 = vmatpush1.msra.mxu0 %v1750
    %2016 = vmatprep.subr.mxu0 0.0
    %2017 = vmatpush1.msra.mxu0 %v1751
    %2018 = vmatprep.subr.mxu0 0.0
    %2019 = vmatpush1.msra.mxu0 %v1752
    %2020 = vmatprep.subr.mxu0 0.0
    %2021 = vmatpush1.msra.mxu0 %v1753
    %2022 = vmatprep.subr.mxu0 0.0
    %2023 = vmatpush1.msra.mxu0 %v1754
    %2024 = vmatprep.subr.mxu0 0.0
    %2025 = vmatpush1.msra.mxu0 %v1755
    %2026 = vmatprep.subr.mxu0 0.0
    %2027 = vmatpush1.msra.mxu0 %v1756
    %2028 = vmatprep.subr.mxu0 0.0
    %2029 = vmatpush1.msra.mxu0 %v1757
    %2030 = vmatprep.subr.mxu0 0.0
    %2031 = vmatpush1.msra.mxu0 %v1758
    %2032 = vmatprep.subr.mxu0 0.0
    %2033 = vmatpush1.msra.mxu0 %v1759
    %2034 = vmatprep.subr.mxu0 0.0
    %2035 = vmatpush1.msra.mxu0 %v1760
    %2036 = vmatprep.subr.mxu0 0.0
    %2037 = vmatpush1.msra.mxu0 %v1761
    %2038 = vmatprep.subr.mxu0 0.0
    %2039 = vmatpush1.msra.mxu0 %v1762
    %2040 = vmatprep.subr.mxu0 0.0
    %2041 = vmatpush1.msra.mxu0 %v1763
    %2042 = vmatprep.subr.mxu0 0.0
    %2043 = vmatpush1.msra.mxu0 %v1764
    %2044 = vmatprep.subr.mxu0 0.0
    %2045 = vmatpush1.msra.mxu0 %v1765
    %2046 = vmatprep.subr.mxu0 0.0
    %2047 = vmatpush1.msra.mxu0 %v1766
    %2048 = vmatprep.mubr.f32.mxu0 %v1638
    %2049 = vmatmul.mubr.f32.gmra.mrb[0].mxu0 %v1637
    %v2050 = vpop.f32.mrb[0].mxu0
    %v2051 = vadd.f32 %v1981, %v2050
    %v2052 = vpop.f32.mrb[0].mxu0
    %2053 = vdwg.mxu0
    %vm2054 = vcmp.ge.f32.partialorder %v2051, 0.0
    %v2055 = vmul.f32 %v2051, 0.2
    %v2056 = vsel %vm2054, %v2051, %v2055
    %2057 = vst.msk [vmem:[%s9] sm:$0xff] %vm167, %v2056
    // Predicated region
    $region46: #{ae_forward.1} parent=1 // pred_check
      _
    $region47: #{ae_forward.1} parent=1 // pred_check_branch
      %2059 = sbr.rel (0) target = $region49
    $region48: #{ae_forward.1} parent=1 // pred_region
      _
    $region49: #{ae_forward.1} parent=1 // pred_fallthru
      _
    // Predicated region
    $region50: #{ae_forward.1} parent=1 // pred_check
      _
    $region51: #{ae_forward.1} parent=1 // pred_check_branch
      %2061 = sbr.rel (0) target = $region53
    $region52: #{ae_forward.1} parent=1 // pred_region
      _
    $region53: #{ae_forward.1} parent=1 // pred_fallthru
      _
    %2062 = vsyncpa [#allocation3], 1
    %2063 = vsyncpa [#allocation5], 1

</llo_original>
